<compile_context>
chip_gen: v7x
topology: tpu7x:2x2x1
jax: 0.10.0
libtpu: 0.0.40
codegen_flags: <defaults>
</compile_context>

<pallas_src>
import math
from functools import partial

import jax
import jax.numpy as jnp
from jax.experimental import pallas as pl
from jax.experimental.pallas import tpu as pltpu

SIZE = 16          # final quadratic patch size
C = 3              # module's stats imply 3 channels
MEAN = (0.3211, 0.2243, 0.1602)
STD = (0.2617, 0.1825, 0.1308)


# --------------------------------------------------------------------------
# Pallas kernel
# --------------------------------------------------------------------------
def _simclr_kernel(size, x_ref, ry_ref, cx_ref, rot_ref, kb_ref, jit_ref,
                   norm_ref, o_ref):
    p = size * size

    ry = ry_ref[...]            # (bblk, S, H)  bf16
    cxT = cx_ref[...]           # (bblk, W, S)  bf16

    # 1) RandomResizedCrop + horizontal flip, separable: Y_c = Ry @ X_c @ Cx^T
    #    (two small batched MXU matmuls per channel, f32 accumulation).
    ys = []
    for c in range(C):
        xc = x_ref[:, c]                                       # (bblk, H, W) bf16
        u = jnp.einsum("bhw,bws->bhs", xc, cxT,
                       preferred_element_type=jnp.float32)     # (bblk, H, S)
        y = jnp.einsum("bih,bhs->bis", ry, u.astype(jnp.bfloat16),
                       preferred_element_type=jnp.float32)     # (bblk, S, S)
        ys.append(y)
    y2d = jnp.stack(ys, axis=1).astype(jnp.bfloat16)           # (bblk, C, S, S)

    # 2) Rotation (bilinear, zero fill) of the SxS crop, accumulated directly
    #    into the lane-dense flat (bblk, C, P) layout: one small batched
    #    matmul per source row (16 total).
    img = jnp.einsum("bcj,bjp->bcp", y2d[:, :, 0, :], rot_ref[:, 0],
                     preferred_element_type=jnp.float32)
    for i in range(1, size):
        img = img + jnp.einsum("bcj,bjp->bcp", y2d[:, :, i, :], rot_ref[:, i],
                               preferred_element_type=jnp.float32)

    # 3) ColorJitter (brightness -> contrast -> saturation) + RandomGrayscale,
    #    vectorized over the whole (bblk, C, P) slab.
    # TODO(synk): hue jitter (0.2*jitter_s) and torchvision's random
    # ColorJitter op order are not implemented.
    jit = jit_ref[...]                                         # (bblk, 4, 1)
    bright = jit[:, 0:1, :]
    contrast = jit[:, 1:2, :]
    sat = jit[:, 2:3, :]
    gray = jit[:, 3:4, :]

    img = jnp.clip(img * bright, 0.0, 1.0)

    lum = 0.299 * img[:, 0:1] + 0.587 * img[:, 1:2] + 0.114 * img[:, 2:3]
    mean_lum = jnp.mean(lum, axis=2, keepdims=True)
    img = jnp.clip(mean_lum + contrast * (img - mean_lum), 0.0, 1.0)

    lum = 0.299 * img[:, 0:1] + 0.587 * img[:, 1:2] + 0.114 * img[:, 2:3]
    img = jnp.clip(lum + sat * (img - lum), 0.0, 1.0)

    lum = 0.299 * img[:, 0:1] + 0.587 * img[:, 1:2] + 0.114 * img[:, 2:3]
    img = gray * lum + (1.0 - gray) * img

    # 4) Gaussian blur as one (C,P)@(P,P) bf16 matmul (identity when skipped)
    # 5) Normalize (mean / 1/std passed as an input block -> no captured
    #    constants), fused into the single lane-dense 256-wide store.
    norm = norm_ref[...]                                       # (2, C, 1) f32
    blurred = jnp.einsum("bcp,bpq->bcq", img.astype(jnp.bfloat16), kb_ref[...],
                         preferred_element_type=jnp.float32)
    o_ref[...] = (blurred - norm[0:1]) * norm[1:2]


def _pick_bblk(B, H, W):
    """Images per grid step: keep >=2 grid steps (v7x 2 TCs) and a modest
    per-step image block (v5e 16 MiB scoped-VMEM default)."""
    vmem_cap = max(1, (4 * 1024 * 1024) // (C * H * W * 2))   # ~4 MB bf16/block
    cap = min(8, vmem_cap)
    if B >= 2:
        cap = min(cap, B // 2)
    cap = max(cap, 1)
    for d in range(cap, 0, -1):
        if B % d == 0:
            return d
    return 1


def _pallas_simclr(x, ry, cxT, rotw, kb, jits, norm, size):
    B, Cc, H, W = x.shape
    p = size * size
    bblk = _pick_bblk(B, H, W)
    grid = (B // bblk,)

    return pl.pallas_call(
        partial(_simclr_kernel, size),
        out_shape=jax.ShapeDtypeStruct((B, C, p), jnp.float32),
        grid=grid,
        in_specs=[
            pl.BlockSpec((bblk, Cc, H, W), lambda b: (b, 0, 0, 0)),   # image bf16
            pl.BlockSpec((bblk, size, H), lambda b: (b, 0, 0)),       # Ry bf16
            pl.BlockSpec((bblk, W, size), lambda b: (b, 0, 0)),       # Cx^T bf16
            pl.BlockSpec((bblk, size, size, p), lambda b: (b, 0, 0, 0)),  # rot bf16
            pl.BlockSpec((bblk, p, p), lambda b: (b, 0, 0)),          # kron blur bf16
            pl.BlockSpec((bblk, 4, 1), lambda b: (b, 0, 0)),          # jitter scalars
            pl.BlockSpec((2, Cc, 1), lambda b: (0, 0, 0)),            # mean / 1/std
        ],
        out_specs=pl.BlockSpec((bblk, Cc, p), lambda b: (b, 0, 0)),
        compiler_params=pltpu.CompilerParams(
            dimension_semantics=("parallel",)),
    )(x, ry, cxT, rotw, kb, jits, norm)


# --------------------------------------------------------------------------
# Glue: sample random augmentation parameters and build per-image operands
# --------------------------------------------------------------------------
def _make_crop_matrices(key, H, W, size, resize_scale, resize_ratio, flip_p):
    """Separable bilinear resample matrices for RandomResizedCrop (+flip)."""
    ks = jax.random.split(key, 5)
    area = float(H * W)
    scale = jax.random.uniform(ks[0], (), minval=resize_scale[0],
                               maxval=resize_scale[1])
    log_ratio = jax.random.uniform(ks[1], (), minval=math.log(resize_ratio[0]),
                                   maxval=math.log(resize_ratio[1]))
    ratio = jnp.exp(log_ratio)
    target_area = scale * area
    crop_w = jnp.clip(jnp.sqrt(target_area * ratio), 1.0, float(W))
    crop_h = jnp.clip(jnp.sqrt(target_area / ratio), 1.0, float(H))
    y0 = jax.random.uniform(ks[2], ()) * (H - crop_h)
    x0 = jax.random.uniform(ks[3], ()) * (W - crop_w)
    flip = jax.random.uniform(ks[4], ()) < flip_p

    iy = jnp.arange(size, dtype=jnp.float32)
    jx = jnp.arange(size, dtype=jnp.float32)
    jx = jnp.where(flip, (size - 1.0) - jx, jx)
    src_y = jnp.clip(y0 + (iy + 0.5) / size * crop_h - 0.5, 0.0, H - 1.0)
    src_x = jnp.clip(x0 + (jx + 0.5) / size * crop_w - 0.5, 0.0, W - 1.0)

    rows = jnp.arange(H, dtype=jnp.float32)
    cols = jnp.arange(W, dtype=jnp.float32)
    ry = jnp.clip(1.0 - jnp.abs(src_y[:, None] - rows[None, :]), 0.0, 1.0)   # (S,H)
    cx = jnp.clip(1.0 - jnp.abs(src_x[:, None] - cols[None, :]), 0.0, 1.0)   # (S,W)
    # TODO(synk): torchvision's antialiased resize (low-pass when downscaling)
    # is not modeled; this is plain 2-tap bilinear resampling.
    return ry.astype(jnp.bfloat16), cx.T.astype(jnp.bfloat16)   # (S,H), (W,S)


def _make_rotation_matrix(key, size, rotate, rotate_p, rotate_deg):
    """Bilinear rotation resample of the SxS crop, laid out (i, j, p_out)."""
    ka, kb = jax.random.split(key)
    do_rot = (jax.random.uniform(ka, ()) < rotate_p) & rotate
    angle = jnp.where(do_rot,
                      jax.random.uniform(kb, (), minval=-float(rotate_deg),
                                         maxval=float(rotate_deg)),
                      0.0) * (math.pi / 180.0)
    c = (size - 1) / 2.0
    off = jnp.arange(size, dtype=jnp.float32) - c
    gy, gx = jnp.meshgrid(off, off, indexing="ij")   # output (i2, j2) offsets
    ca, sa = jnp.cos(angle), jnp.sin(angle)
    sx = c + ca * gx + sa * gy                       # inverse-rotated source coords
    sy = c - sa * gx + ca * gy
    taps = jnp.arange(size, dtype=jnp.float32)
    wy = jnp.clip(1.0 - jnp.abs(sy[..., None] - taps), 0.0, 1.0)   # (S,S,S) over i
    wx = jnp.clip(1.0 - jnp.abs(sx[..., None] - taps), 0.0, 1.0)   # (S,S,S) over j
    rot4 = wy[:, :, :, None] * wx[:, :, None, :]      # (i2, j2, i, j); zero fill
    rotw = jnp.transpose(rot4, (2, 3, 0, 1)).reshape(size, size, size * size)
    return rotw.astype(jnp.bfloat16)                  # identity when angle == 0


def _make_blur_matrix(key, size, blur_s, blur_p, blur, ref_size=224.0):
    ka, kb = jax.random.split(key)
    do_blur = (jax.random.uniform(ka, ()) < blur_p) & blur
    # sigma range is defined w.r.t. a nominal 224px image; rescale to `size`
    sigma = jax.random.uniform(kb, (), minval=float(blur_s[0]),
                               maxval=float(blur_s[1])) * (size / ref_size)
    sigma = jnp.maximum(sigma, 1e-3)
    idx = jnp.arange(size, dtype=jnp.float32)
    d = idx[:, None] - idx[None, :]
    g = jnp.exp(-(d ** 2) / (2.0 * sigma ** 2))
    g = g / jnp.sum(g, axis=1, keepdims=True)
    g = jnp.where(do_blur, g, jnp.eye(size, dtype=jnp.float32))
    # row-major vec(G @ X @ G.T) = kron(G, G) @ vec(X); kernel right-multiplies
    # the flat (C, P) image, so pass the transpose (bf16 -> half the bytes).
    return jnp.kron(g, g).T.astype(jnp.bfloat16)


def _make_jitter_params(key, jitter_s, jitter_p, jitter, bw_p, bw):
    ks = jax.random.split(key, 5)
    do_jit = ((jax.random.uniform(ks[0], ()) < jitter_p) & jitter)
    do_jit = do_jit.astype(jnp.float32)
    lo = max(0.0, 1.0 - 0.8 * jitter_s)
    hi = 1.0 + 0.8 * jitter_s
    bright = jax.random.uniform(ks[1], (), minval=lo, maxval=hi)
    contrast = jax.random.uniform(ks[2], (), minval=lo, maxval=hi)
    sat = jax.random.uniform(ks[3], (), minval=lo, maxval=hi)
    bright = 1.0 + do_jit * (bright - 1.0)
    contrast = 1.0 + do_jit * (contrast - 1.0)
    sat = 1.0 + do_jit * (sat - 1.0)
    gray_f = ((jax.random.uniform(ks[4], ()) < bw_p) & bw).astype(jnp.float32)
    return jnp.stack([bright, contrast, sat, gray_f])


def simclr_aug(x, key, *, size=SIZE, rotate=True, jitter=True, bw=True,
               blur=True, resize_scale=(0.2, 1.0),
               resize_ratio=(0.75, 4.0 / 3.0), rotate_deg=30, jitter_s=0.6,
               blur_s=(4, 32), flip_p=0.5, rotate_p=0.3, jitter_p=0.3,
               bw_p=0.3, blur_p=0.3):
    """SimCLRAug.forward: x (B,3,H,W) float32 in [0,1] -> (B,3,size,size)."""
    B, Cc, H, W = x.shape
    assert Cc == C, "module stats imply 3 channels"
    # TODO(synk): same_on_batch=True (shared params across the batch) not implemented.

    keys = jax.random.split(key, B)

    def per_image(k):
        k1, k2, k3, k4 = jax.random.split(k, 4)
        ry, cxT = _make_crop_matrices(k1, H, W, size, resize_scale,
                                      resize_ratio, flip_p)
        rotw = _make_rotation_matrix(k2, size, rotate, rotate_p, rotate_deg)
        kb = _make_blur_matrix(k3, size, blur_s, blur_p, blur)
        jit = _make_jitter_params(k4, jitter_s, jitter_p, jitter, bw_p, bw)
        return ry, cxT, rotw, kb, jit

    ry, cxT, rotw, kb, jits = jax.vmap(per_image)(keys)

    norm = jnp.stack([jnp.array(MEAN, dtype=jnp.float32),
                      1.0 / jnp.array(STD, dtype=jnp.float32)]).reshape(2, C, 1)

    out_flat = _pallas_simclr(x.astype(jnp.bfloat16),
                              ry, cxT, rotw, kb,
                              jits.reshape(B, 4, 1).astype(jnp.float32),
                              norm, size)
    return out_flat.reshape(B, C, size, size)


if __name__ == "__main__":
    key = jax.random.PRNGKey(0)
    kx, ka = jax.random.split(key)
    x = jax.random.uniform(kx, (2, 3, 16, 16), dtype=jnp.float32)  # NCHW in [0,1]
    out = simclr_aug(x, ka, size=SIZE)
    out = jax.block_until_ready(out)
    assert out.shape == (2, C, SIZE, SIZE) and out.dtype == jnp.float32
    assert bool(jnp.all(jnp.isfinite(out)))
    print("KERNEL_OK")
</pallas_src>

<mosaic_0001>
module attributes {stable_mosaic.version = 11 : i64} {
  func.func @_simclr_kernel(%arg0: i32, %arg1: memref<1x3x16x16xbf16, #tpu.memory_space<vmem>>, %arg2: memref<1x16x16xbf16, #tpu.memory_space<vmem>>, %arg3: memref<1x16x16xbf16, #tpu.memory_space<vmem>>, %arg4: memref<1x16x16x256xbf16, #tpu.memory_space<vmem>>, %arg5: memref<1x256x256xbf16, #tpu.memory_space<vmem>>, %arg6: memref<1x4x1xf32, #tpu.memory_space<vmem>>, %arg7: memref<2x3x1xf32, #tpu.memory_space<vmem>>, %arg8: memref<1x3x256xf32, #tpu.memory_space<vmem>>) attributes {dimension_semantics = [#tpu.dimension_semantics<parallel>], iteration_bounds = array<i64: 2>, scalar_prefetch = 0 : i64, scratch_operands = 0 : i64, tpu.core_type = #tpu.core_type<tc>, window_params = [{transform_indices = @transform_0, window_bounds = array<i64: 1, 3, 16, 16>}, {transform_indices = @transform_1, window_bounds = array<i64: 1, 16, 16>}, {transform_indices = @transform_2, window_bounds = array<i64: 1, 16, 16>}, {transform_indices = @transform_3, window_bounds = array<i64: 1, 16, 16, 256>}, {transform_indices = @transform_4, window_bounds = array<i64: 1, 256, 256>}, {transform_indices = @transform_5, window_bounds = array<i64: 1, 4, 1>}, {pipeline_mode = #tpu.pipeline_mode<synchronous>, transform_indices = @transform_6, window_bounds = array<i64: 2, 3, 1>}, {transform_indices = @transform_7, window_bounds = array<i64: 1, 3, 256>}]} {
    %c0 = arith.constant 0 : index
    %c0_0 = arith.constant 0 : index
    %c0_1 = arith.constant 0 : index
    %0 = vector.load %arg2[%c0, %c0_0, %c0_1] : memref<1x16x16xbf16, #tpu.memory_space<vmem>>, vector<1x16x16xbf16>
    %c0_2 = arith.constant 0 : index
    %c0_3 = arith.constant 0 : index
    %c0_4 = arith.constant 0 : index
    %1 = vector.load %arg3[%c0_2, %c0_3, %c0_4] : memref<1x16x16xbf16, #tpu.memory_space<vmem>>, vector<1x16x16xbf16>
    %c0_5 = arith.constant 0 : index
    %c0_6 = arith.constant 0 : index
    %c0_7 = arith.constant 0 : index
    %c0_8 = arith.constant 0 : index
    %2 = vector.load %arg1[%c0_5, %c0_6, %c0_7, %c0_8] : memref<1x3x16x16xbf16, #tpu.memory_space<vmem>>, vector<1x1x16x16xbf16>
    %3 = vector.shape_cast %2 : vector<1x1x16x16xbf16> to vector<1x16x16xbf16>
    "tpu.trace_start"() <{level = 10 : i32, message = "bhw,bws->bhs"}> : () -> ()
    %cst = arith.constant dense<0.000000e+00> : vector<1x16x16xf32>
    %4 = tpu.matmul %3, %1, %cst {dimension_numbers = #tpu.dot_dimension_numbers<[2], [1], [1], [2], [0, 0, 0, 1, 1, 2], [0], [0]>} : vector<1x16x16xbf16>, vector<1x16x16xbf16>, vector<1x16x16xf32> -> vector<1x16x16xf32>
    "tpu.trace_stop"() : () -> ()
    %5 = arith.truncf %4 : vector<1x16x16xf32> to vector<1x16x16xbf16>
    "tpu.trace_start"() <{level = 10 : i32, message = "bih,bhs->bis"}> : () -> ()
    %cst_9 = arith.constant dense<0.000000e+00> : vector<1x16x16xf32>
    %6 = tpu.matmul %0, %5, %cst_9 {dimension_numbers = #tpu.dot_dimension_numbers<[2], [1], [1], [2], [0, 0, 0, 1, 1, 2], [0], [0]>} : vector<1x16x16xbf16>, vector<1x16x16xbf16>, vector<1x16x16xf32> -> vector<1x16x16xf32>
    "tpu.trace_stop"() : () -> ()
    %c0_10 = arith.constant 0 : index
    %c1 = arith.constant 1 : index
    %c0_11 = arith.constant 0 : index
    %c0_12 = arith.constant 0 : index
    %7 = vector.load %arg1[%c0_10, %c1, %c0_11, %c0_12] : memref<1x3x16x16xbf16, #tpu.memory_space<vmem>>, vector<1x1x16x16xbf16>
    %8 = vector.shape_cast %7 : vector<1x1x16x16xbf16> to vector<1x16x16xbf16>
    "tpu.trace_start"() <{level = 10 : i32, message = "bhw,bws->bhs"}> : () -> ()
    %cst_13 = arith.constant dense<0.000000e+00> : vector<1x16x16xf32>
    %9 = tpu.matmul %8, %1, %cst_13 {dimension_numbers = #tpu.dot_dimension_numbers<[2], [1], [1], [2], [0, 0, 0, 1, 1, 2], [0], [0]>} : vector<1x16x16xbf16>, vector<1x16x16xbf16>, vector<1x16x16xf32> -> vector<1x16x16xf32>
    "tpu.trace_stop"() : () -> ()
    %10 = arith.truncf %9 : vector<1x16x16xf32> to vector<1x16x16xbf16>
    "tpu.trace_start"() <{level = 10 : i32, message = "bih,bhs->bis"}> : () -> ()
    %cst_14 = arith.constant dense<0.000000e+00> : vector<1x16x16xf32>
    %11 = tpu.matmul %0, %10, %cst_14 {dimension_numbers = #tpu.dot_dimension_numbers<[2], [1], [1], [2], [0, 0, 0, 1, 1, 2], [0], [0]>} : vector<1x16x16xbf16>, vector<1x16x16xbf16>, vector<1x16x16xf32> -> vector<1x16x16xf32>
    "tpu.trace_stop"() : () -> ()
    %c0_15 = arith.constant 0 : index
    %c2 = arith.constant 2 : index
    %c0_16 = arith.constant 0 : index
    %c0_17 = arith.constant 0 : index
    %12 = vector.load %arg1[%c0_15, %c2, %c0_16, %c0_17] : memref<1x3x16x16xbf16, #tpu.memory_space<vmem>>, vector<1x1x16x16xbf16>
    %13 = vector.shape_cast %12 : vector<1x1x16x16xbf16> to vector<1x16x16xbf16>
    "tpu.trace_start"() <{level = 10 : i32, message = "bhw,bws->bhs"}> : () -> ()
    %cst_18 = arith.constant dense<0.000000e+00> : vector<1x16x16xf32>
    %14 = tpu.matmul %13, %1, %cst_18 {dimension_numbers = #tpu.dot_dimension_numbers<[2], [1], [1], [2], [0, 0, 0, 1, 1, 2], [0], [0]>} : vector<1x16x16xbf16>, vector<1x16x16xbf16>, vector<1x16x16xf32> -> vector<1x16x16xf32>
    "tpu.trace_stop"() : () -> ()
    %15 = arith.truncf %14 : vector<1x16x16xf32> to vector<1x16x16xbf16>
    "tpu.trace_start"() <{level = 10 : i32, message = "bih,bhs->bis"}> : () -> ()
    %cst_19 = arith.constant dense<0.000000e+00> : vector<1x16x16xf32>
    %16 = tpu.matmul %0, %15, %cst_19 {dimension_numbers = #tpu.dot_dimension_numbers<[2], [1], [1], [2], [0, 0, 0, 1, 1, 2], [0], [0]>} : vector<1x16x16xbf16>, vector<1x16x16xbf16>, vector<1x16x16xf32> -> vector<1x16x16xf32>
    "tpu.trace_stop"() : () -> ()
    %17 = vector.shape_cast %6 : vector<1x16x16xf32> to vector<1x1x16x16xf32>
    %18 = vector.shape_cast %11 : vector<1x16x16xf32> to vector<1x1x16x16xf32>
    %19 = vector.shape_cast %16 : vector<1x16x16xf32> to vector<1x1x16x16xf32>
    %20 = tpu.concatenate %17, %18, %19 in 1 : vector<1x1x16x16xf32>, vector<1x1x16x16xf32>, vector<1x1x16x16xf32> -> vector<1x3x16x16xf32>
    %21 = arith.truncf %20 : vector<1x3x16x16xf32> to vector<1x3x16x16xbf16>
    %22 = vector.extract_strided_slice %21 {offsets = [0, 0, 0, 0], sizes = [1, 3, 1, 16], strides = [1, 1, 1, 1]} : vector<1x3x16x16xbf16> to vector<1x3x1x16xbf16>
    %23 = vector.shape_cast %22 : vector<1x3x1x16xbf16> to vector<1x3x16xbf16>
    %c0_20 = arith.constant 0 : index
    %c0_21 = arith.constant 0 : index
    %c0_22 = arith.constant 0 : index
    %c0_23 = arith.constant 0 : index
    %24 = vector.load %arg4[%c0_20, %c0_21, %c0_22, %c0_23] : memref<1x16x16x256xbf16, #tpu.memory_space<vmem>>, vector<1x1x16x256xbf16>
    %25 = vector.shape_cast %24 : vector<1x1x16x256xbf16> to vector<1x16x256xbf16>
    "tpu.trace_start"() <{level = 10 : i32, message = "bcj,bjp->bcp"}> : () -> ()
    %cst_24 = arith.constant dense<0.000000e+00> : vector<1x3x256xf32>
    %26 = tpu.matmul %23, %25, %cst_24 {dimension_numbers = #tpu.dot_dimension_numbers<[2], [1], [1], [2], [0, 0, 0, 1, 1, 2], [0], [0]>} : vector<1x3x16xbf16>, vector<1x16x256xbf16>, vector<1x3x256xf32> -> vector<1x3x256xf32>
    "tpu.trace_stop"() : () -> ()
    %27 = vector.extract_strided_slice %21 {offsets = [0, 0, 1, 0], sizes = [1, 3, 1, 16], strides = [1, 1, 1, 1]} : vector<1x3x16x16xbf16> to vector<1x3x1x16xbf16>
    %28 = vector.shape_cast %27 : vector<1x3x1x16xbf16> to vector<1x3x16xbf16>
    %c0_25 = arith.constant 0 : index
    %c1_26 = arith.constant 1 : index
    %c0_27 = arith.constant 0 : index
    %c0_28 = arith.constant 0 : index
    %29 = vector.load %arg4[%c0_25, %c1_26, %c0_27, %c0_28] : memref<1x16x16x256xbf16, #tpu.memory_space<vmem>>, vector<1x1x16x256xbf16>
    %30 = vector.shape_cast %29 : vector<1x1x16x256xbf16> to vector<1x16x256xbf16>
    "tpu.trace_start"() <{level = 10 : i32, message = "bcj,bjp->bcp"}> : () -> ()
    %cst_29 = arith.constant dense<0.000000e+00> : vector<1x3x256xf32>
    %31 = tpu.matmul %28, %30, %cst_29 {dimension_numbers = #tpu.dot_dimension_numbers<[2], [1], [1], [2], [0, 0, 0, 1, 1, 2], [0], [0]>} : vector<1x3x16xbf16>, vector<1x16x256xbf16>, vector<1x3x256xf32> -> vector<1x3x256xf32>
    "tpu.trace_stop"() : () -> ()
    %32 = arith.addf %26, %31 : vector<1x3x256xf32>
    %33 = vector.extract_strided_slice %21 {offsets = [0, 0, 2, 0], sizes = [1, 3, 1, 16], strides = [1, 1, 1, 1]} : vector<1x3x16x16xbf16> to vector<1x3x1x16xbf16>
    %34 = vector.shape_cast %33 : vector<1x3x1x16xbf16> to vector<1x3x16xbf16>
    %c0_30 = arith.constant 0 : index
    %c2_31 = arith.constant 2 : index
    %c0_32 = arith.constant 0 : index
    %c0_33 = arith.constant 0 : index
    %35 = vector.load %arg4[%c0_30, %c2_31, %c0_32, %c0_33] : memref<1x16x16x256xbf16, #tpu.memory_space<vmem>>, vector<1x1x16x256xbf16>
    %36 = vector.shape_cast %35 : vector<1x1x16x256xbf16> to vector<1x16x256xbf16>
    "tpu.trace_start"() <{level = 10 : i32, message = "bcj,bjp->bcp"}> : () -> ()
    %cst_34 = arith.constant dense<0.000000e+00> : vector<1x3x256xf32>
    %37 = tpu.matmul %34, %36, %cst_34 {dimension_numbers = #tpu.dot_dimension_numbers<[2], [1], [1], [2], [0, 0, 0, 1, 1, 2], [0], [0]>} : vector<1x3x16xbf16>, vector<1x16x256xbf16>, vector<1x3x256xf32> -> vector<1x3x256xf32>
    "tpu.trace_stop"() : () -> ()
    %38 = arith.addf %32, %37 : vector<1x3x256xf32>
    %39 = vector.extract_strided_slice %21 {offsets = [0, 0, 3, 0], sizes = [1, 3, 1, 16], strides = [1, 1, 1, 1]} : vector<1x3x16x16xbf16> to vector<1x3x1x16xbf16>
    %40 = vector.shape_cast %39 : vector<1x3x1x16xbf16> to vector<1x3x16xbf16>
    %c0_35 = arith.constant 0 : index
    %c3 = arith.constant 3 : index
    %c0_36 = arith.constant 0 : index
    %c0_37 = arith.constant 0 : index
    %41 = vector.load %arg4[%c0_35, %c3, %c0_36, %c0_37] : memref<1x16x16x256xbf16, #tpu.memory_space<vmem>>, vector<1x1x16x256xbf16>
    %42 = vector.shape_cast %41 : vector<1x1x16x256xbf16> to vector<1x16x256xbf16>
    "tpu.trace_start"() <{level = 10 : i32, message = "bcj,bjp->bcp"}> : () -> ()
    %cst_38 = arith.constant dense<0.000000e+00> : vector<1x3x256xf32>
    %43 = tpu.matmul %40, %42, %cst_38 {dimension_numbers = #tpu.dot_dimension_numbers<[2], [1], [1], [2], [0, 0, 0, 1, 1, 2], [0], [0]>} : vector<1x3x16xbf16>, vector<1x16x256xbf16>, vector<1x3x256xf32> -> vector<1x3x256xf32>
    "tpu.trace_stop"() : () -> ()
    %44 = arith.addf %38, %43 : vector<1x3x256xf32>
    %45 = vector.extract_strided_slice %21 {offsets = [0, 0, 4, 0], sizes = [1, 3, 1, 16], strides = [1, 1, 1, 1]} : vector<1x3x16x16xbf16> to vector<1x3x1x16xbf16>
    %46 = vector.shape_cast %45 : vector<1x3x1x16xbf16> to vector<1x3x16xbf16>
    %c0_39 = arith.constant 0 : index
    %c4 = arith.constant 4 : index
    %c0_40 = arith.constant 0 : index
    %c0_41 = arith.constant 0 : index
    %47 = vector.load %arg4[%c0_39, %c4, %c0_40, %c0_41] : memref<1x16x16x256xbf16, #tpu.memory_space<vmem>>, vector<1x1x16x256xbf16>
    %48 = vector.shape_cast %47 : vector<1x1x16x256xbf16> to vector<1x16x256xbf16>
    "tpu.trace_start"() <{level = 10 : i32, message = "bcj,bjp->bcp"}> : () -> ()
    %cst_42 = arith.constant dense<0.000000e+00> : vector<1x3x256xf32>
    %49 = tpu.matmul %46, %48, %cst_42 {dimension_numbers = #tpu.dot_dimension_numbers<[2], [1], [1], [2], [0, 0, 0, 1, 1, 2], [0], [0]>} : vector<1x3x16xbf16>, vector<1x16x256xbf16>, vector<1x3x256xf32> -> vector<1x3x256xf32>
    "tpu.trace_stop"() : () -> ()
    %50 = arith.addf %44, %49 : vector<1x3x256xf32>
    %51 = vector.extract_strided_slice %21 {offsets = [0, 0, 5, 0], sizes = [1, 3, 1, 16], strides = [1, 1, 1, 1]} : vector<1x3x16x16xbf16> to vector<1x3x1x16xbf16>
    %52 = vector.shape_cast %51 : vector<1x3x1x16xbf16> to vector<1x3x16xbf16>
    %c0_43 = arith.constant 0 : index
    %c5 = arith.constant 5 : index
    %c0_44 = arith.constant 0 : index
    %c0_45 = arith.constant 0 : index
    %53 = vector.load %arg4[%c0_43, %c5, %c0_44, %c0_45] : memref<1x16x16x256xbf16, #tpu.memory_space<vmem>>, vector<1x1x16x256xbf16>
    %54 = vector.shape_cast %53 : vector<1x1x16x256xbf16> to vector<1x16x256xbf16>
    "tpu.trace_start"() <{level = 10 : i32, message = "bcj,bjp->bcp"}> : () -> ()
    %cst_46 = arith.constant dense<0.000000e+00> : vector<1x3x256xf32>
    %55 = tpu.matmul %52, %54, %cst_46 {dimension_numbers = #tpu.dot_dimension_numbers<[2], [1], [1], [2], [0, 0, 0, 1, 1, 2], [0], [0]>} : vector<1x3x16xbf16>, vector<1x16x256xbf16>, vector<1x3x256xf32> -> vector<1x3x256xf32>
    "tpu.trace_stop"() : () -> ()
    %56 = arith.addf %50, %55 : vector<1x3x256xf32>
    %57 = vector.extract_strided_slice %21 {offsets = [0, 0, 6, 0], sizes = [1, 3, 1, 16], strides = [1, 1, 1, 1]} : vector<1x3x16x16xbf16> to vector<1x3x1x16xbf16>
    %58 = vector.shape_cast %57 : vector<1x3x1x16xbf16> to vector<1x3x16xbf16>
    %c0_47 = arith.constant 0 : index
    %c6 = arith.constant 6 : index
    %c0_48 = arith.constant 0 : index
    %c0_49 = arith.constant 0 : index
    %59 = vector.load %arg4[%c0_47, %c6, %c0_48, %c0_49] : memref<1x16x16x256xbf16, #tpu.memory_space<vmem>>, vector<1x1x16x256xbf16>
    %60 = vector.shape_cast %59 : vector<1x1x16x256xbf16> to vector<1x16x256xbf16>
    "tpu.trace_start"() <{level = 10 : i32, message = "bcj,bjp->bcp"}> : () -> ()
    %cst_50 = arith.constant dense<0.000000e+00> : vector<1x3x256xf32>
    %61 = tpu.matmul %58, %60, %cst_50 {dimension_numbers = #tpu.dot_dimension_numbers<[2], [1], [1], [2], [0, 0, 0, 1, 1, 2], [0], [0]>} : vector<1x3x16xbf16>, vector<1x16x256xbf16>, vector<1x3x256xf32> -> vector<1x3x256xf32>
    "tpu.trace_stop"() : () -> ()
    %62 = arith.addf %56, %61 : vector<1x3x256xf32>
    %63 = vector.extract_strided_slice %21 {offsets = [0, 0, 7, 0], sizes = [1, 3, 1, 16], strides = [1, 1, 1, 1]} : vector<1x3x16x16xbf16> to vector<1x3x1x16xbf16>
    %64 = vector.shape_cast %63 : vector<1x3x1x16xbf16> to vector<1x3x16xbf16>
    %c0_51 = arith.constant 0 : index
    %c7 = arith.constant 7 : index
    %c0_52 = arith.constant 0 : index
    %c0_53 = arith.constant 0 : index
    %65 = vector.load %arg4[%c0_51, %c7, %c0_52, %c0_53] : memref<1x16x16x256xbf16, #tpu.memory_space<vmem>>, vector<1x1x16x256xbf16>
    %66 = vector.shape_cast %65 : vector<1x1x16x256xbf16> to vector<1x16x256xbf16>
    "tpu.trace_start"() <{level = 10 : i32, message = "bcj,bjp->bcp"}> : () -> ()
    %cst_54 = arith.constant dense<0.000000e+00> : vector<1x3x256xf32>
    %67 = tpu.matmul %64, %66, %cst_54 {dimension_numbers = #tpu.dot_dimension_numbers<[2], [1], [1], [2], [0, 0, 0, 1, 1, 2], [0], [0]>} : vector<1x3x16xbf16>, vector<1x16x256xbf16>, vector<1x3x256xf32> -> vector<1x3x256xf32>
    "tpu.trace_stop"() : () -> ()
    %68 = arith.addf %62, %67 : vector<1x3x256xf32>
    %69 = vector.extract_strided_slice %21 {offsets = [0, 0, 8, 0], sizes = [1, 3, 1, 16], strides = [1, 1, 1, 1]} : vector<1x3x16x16xbf16> to vector<1x3x1x16xbf16>
    %70 = vector.shape_cast %69 : vector<1x3x1x16xbf16> to vector<1x3x16xbf16>
    %c0_55 = arith.constant 0 : index
    %c8 = arith.constant 8 : index
    %c0_56 = arith.constant 0 : index
    %c0_57 = arith.constant 0 : index
    %71 = vector.load %arg4[%c0_55, %c8, %c0_56, %c0_57] : memref<1x16x16x256xbf16, #tpu.memory_space<vmem>>, vector<1x1x16x256xbf16>
    %72 = vector.shape_cast %71 : vector<1x1x16x256xbf16> to vector<1x16x256xbf16>
    "tpu.trace_start"() <{level = 10 : i32, message = "bcj,bjp->bcp"}> : () -> ()
    %cst_58 = arith.constant dense<0.000000e+00> : vector<1x3x256xf32>
    %73 = tpu.matmul %70, %72, %cst_58 {dimension_numbers = #tpu.dot_dimension_numbers<[2], [1], [1], [2], [0, 0, 0, 1, 1, 2], [0], [0]>} : vector<1x3x16xbf16>, vector<1x16x256xbf16>, vector<1x3x256xf32> -> vector<1x3x256xf32>
    "tpu.trace_stop"() : () -> ()
    %74 = arith.addf %68, %73 : vector<1x3x256xf32>
    %75 = vector.extract_strided_slice %21 {offsets = [0, 0, 9, 0], sizes = [1, 3, 1, 16], strides = [1, 1, 1, 1]} : vector<1x3x16x16xbf16> to vector<1x3x1x16xbf16>
    %76 = vector.shape_cast %75 : vector<1x3x1x16xbf16> to vector<1x3x16xbf16>
    %c0_59 = arith.constant 0 : index
    %c9 = arith.constant 9 : index
    %c0_60 = arith.constant 0 : index
    %c0_61 = arith.constant 0 : index
    %77 = vector.load %arg4[%c0_59, %c9, %c0_60, %c0_61] : memref<1x16x16x256xbf16, #tpu.memory_space<vmem>>, vector<1x1x16x256xbf16>
    %78 = vector.shape_cast %77 : vector<1x1x16x256xbf16> to vector<1x16x256xbf16>
    "tpu.trace_start"() <{level = 10 : i32, message = "bcj,bjp->bcp"}> : () -> ()
    %cst_62 = arith.constant dense<0.000000e+00> : vector<1x3x256xf32>
    %79 = tpu.matmul %76, %78, %cst_62 {dimension_numbers = #tpu.dot_dimension_numbers<[2], [1], [1], [2], [0, 0, 0, 1, 1, 2], [0], [0]>} : vector<1x3x16xbf16>, vector<1x16x256xbf16>, vector<1x3x256xf32> -> vector<1x3x256xf32>
    "tpu.trace_stop"() : () -> ()
    %80 = arith.addf %74, %79 : vector<1x3x256xf32>
    %81 = vector.extract_strided_slice %21 {offsets = [0, 0, 10, 0], sizes = [1, 3, 1, 16], strides = [1, 1, 1, 1]} : vector<1x3x16x16xbf16> to vector<1x3x1x16xbf16>
    %82 = vector.shape_cast %81 : vector<1x3x1x16xbf16> to vector<1x3x16xbf16>
    %c0_63 = arith.constant 0 : index
    %c10 = arith.constant 10 : index
    %c0_64 = arith.constant 0 : index
    %c0_65 = arith.constant 0 : index
    %83 = vector.load %arg4[%c0_63, %c10, %c0_64, %c0_65] : memref<1x16x16x256xbf16, #tpu.memory_space<vmem>>, vector<1x1x16x256xbf16>
    %84 = vector.shape_cast %83 : vector<1x1x16x256xbf16> to vector<1x16x256xbf16>
    "tpu.trace_start"() <{level = 10 : i32, message = "bcj,bjp->bcp"}> : () -> ()
    %cst_66 = arith.constant dense<0.000000e+00> : vector<1x3x256xf32>
    %85 = tpu.matmul %82, %84, %cst_66 {dimension_numbers = #tpu.dot_dimension_numbers<[2], [1], [1], [2], [0, 0, 0, 1, 1, 2], [0], [0]>} : vector<1x3x16xbf16>, vector<1x16x256xbf16>, vector<1x3x256xf32> -> vector<1x3x256xf32>
    "tpu.trace_stop"() : () -> ()
    %86 = arith.addf %80, %85 : vector<1x3x256xf32>
    %87 = vector.extract_strided_slice %21 {offsets = [0, 0, 11, 0], sizes = [1, 3, 1, 16], strides = [1, 1, 1, 1]} : vector<1x3x16x16xbf16> to vector<1x3x1x16xbf16>
    %88 = vector.shape_cast %87 : vector<1x3x1x16xbf16> to vector<1x3x16xbf16>
    %c0_67 = arith.constant 0 : index
    %c11 = arith.constant 11 : index
    %c0_68 = arith.constant 0 : index
    %c0_69 = arith.constant 0 : index
    %89 = vector.load %arg4[%c0_67, %c11, %c0_68, %c0_69] : memref<1x16x16x256xbf16, #tpu.memory_space<vmem>>, vector<1x1x16x256xbf16>
    %90 = vector.shape_cast %89 : vector<1x1x16x256xbf16> to vector<1x16x256xbf16>
    "tpu.trace_start"() <{level = 10 : i32, message = "bcj,bjp->bcp"}> : () -> ()
    %cst_70 = arith.constant dense<0.000000e+00> : vector<1x3x256xf32>
    %91 = tpu.matmul %88, %90, %cst_70 {dimension_numbers = #tpu.dot_dimension_numbers<[2], [1], [1], [2], [0, 0, 0, 1, 1, 2], [0], [0]>} : vector<1x3x16xbf16>, vector<1x16x256xbf16>, vector<1x3x256xf32> -> vector<1x3x256xf32>
    "tpu.trace_stop"() : () -> ()
    %92 = arith.addf %86, %91 : vector<1x3x256xf32>
    %93 = vector.extract_strided_slice %21 {offsets = [0, 0, 12, 0], sizes = [1, 3, 1, 16], strides = [1, 1, 1, 1]} : vector<1x3x16x16xbf16> to vector<1x3x1x16xbf16>
    %94 = vector.shape_cast %93 : vector<1x3x1x16xbf16> to vector<1x3x16xbf16>
    %c0_71 = arith.constant 0 : index
    %c12 = arith.constant 12 : index
    %c0_72 = arith.constant 0 : index
    %c0_73 = arith.constant 0 : index
    %95 = vector.load %arg4[%c0_71, %c12, %c0_72, %c0_73] : memref<1x16x16x256xbf16, #tpu.memory_space<vmem>>, vector<1x1x16x256xbf16>
    %96 = vector.shape_cast %95 : vector<1x1x16x256xbf16> to vector<1x16x256xbf16>
    "tpu.trace_start"() <{level = 10 : i32, message = "bcj,bjp->bcp"}> : () -> ()
    %cst_74 = arith.constant dense<0.000000e+00> : vector<1x3x256xf32>
    %97 = tpu.matmul %94, %96, %cst_74 {dimension_numbers = #tpu.dot_dimension_numbers<[2], [1], [1], [2], [0, 0, 0, 1, 1, 2], [0], [0]>} : vector<1x3x16xbf16>, vector<1x16x256xbf16>, vector<1x3x256xf32> -> vector<1x3x256xf32>
    "tpu.trace_stop"() : () -> ()
    %98 = arith.addf %92, %97 : vector<1x3x256xf32>
    %99 = vector.extract_strided_slice %21 {offsets = [0, 0, 13, 0], sizes = [1, 3, 1, 16], strides = [1, 1, 1, 1]} : vector<1x3x16x16xbf16> to vector<1x3x1x16xbf16>
    %100 = vector.shape_cast %99 : vector<1x3x1x16xbf16> to vector<1x3x16xbf16>
    %c0_75 = arith.constant 0 : index
    %c13 = arith.constant 13 : index
    %c0_76 = arith.constant 0 : index
    %c0_77 = arith.constant 0 : index
    %101 = vector.load %arg4[%c0_75, %c13, %c0_76, %c0_77] : memref<1x16x16x256xbf16, #tpu.memory_space<vmem>>, vector<1x1x16x256xbf16>
    %102 = vector.shape_cast %101 : vector<1x1x16x256xbf16> to vector<1x16x256xbf16>
    "tpu.trace_start"() <{level = 10 : i32, message = "bcj,bjp->bcp"}> : () -> ()
    %cst_78 = arith.constant dense<0.000000e+00> : vector<1x3x256xf32>
    %103 = tpu.matmul %100, %102, %cst_78 {dimension_numbers = #tpu.dot_dimension_numbers<[2], [1], [1], [2], [0, 0, 0, 1, 1, 2], [0], [0]>} : vector<1x3x16xbf16>, vector<1x16x256xbf16>, vector<1x3x256xf32> -> vector<1x3x256xf32>
    "tpu.trace_stop"() : () -> ()
    %104 = arith.addf %98, %103 : vector<1x3x256xf32>
    %105 = vector.extract_strided_slice %21 {offsets = [0, 0, 14, 0], sizes = [1, 3, 1, 16], strides = [1, 1, 1, 1]} : vector<1x3x16x16xbf16> to vector<1x3x1x16xbf16>
    %106 = vector.shape_cast %105 : vector<1x3x1x16xbf16> to vector<1x3x16xbf16>
    %c0_79 = arith.constant 0 : index
    %c14 = arith.constant 14 : index
    %c0_80 = arith.constant 0 : index
    %c0_81 = arith.constant 0 : index
    %107 = vector.load %arg4[%c0_79, %c14, %c0_80, %c0_81] : memref<1x16x16x256xbf16, #tpu.memory_space<vmem>>, vector<1x1x16x256xbf16>
    %108 = vector.shape_cast %107 : vector<1x1x16x256xbf16> to vector<1x16x256xbf16>
    "tpu.trace_start"() <{level = 10 : i32, message = "bcj,bjp->bcp"}> : () -> ()
    %cst_82 = arith.constant dense<0.000000e+00> : vector<1x3x256xf32>
    %109 = tpu.matmul %106, %108, %cst_82 {dimension_numbers = #tpu.dot_dimension_numbers<[2], [1], [1], [2], [0, 0, 0, 1, 1, 2], [0], [0]>} : vector<1x3x16xbf16>, vector<1x16x256xbf16>, vector<1x3x256xf32> -> vector<1x3x256xf32>
    "tpu.trace_stop"() : () -> ()
    %110 = arith.addf %104, %109 : vector<1x3x256xf32>
    %111 = vector.extract_strided_slice %21 {offsets = [0, 0, 15, 0], sizes = [1, 3, 1, 16], strides = [1, 1, 1, 1]} : vector<1x3x16x16xbf16> to vector<1x3x1x16xbf16>
    %112 = vector.shape_cast %111 : vector<1x3x1x16xbf16> to vector<1x3x16xbf16>
    %c0_83 = arith.constant 0 : index
    %c15 = arith.constant 15 : index
    %c0_84 = arith.constant 0 : index
    %c0_85 = arith.constant 0 : index
    %113 = vector.load %arg4[%c0_83, %c15, %c0_84, %c0_85] : memref<1x16x16x256xbf16, #tpu.memory_space<vmem>>, vector<1x1x16x256xbf16>
    %114 = vector.shape_cast %113 : vector<1x1x16x256xbf16> to vector<1x16x256xbf16>
    "tpu.trace_start"() <{level = 10 : i32, message = "bcj,bjp->bcp"}> : () -> ()
    %cst_86 = arith.constant dense<0.000000e+00> : vector<1x3x256xf32>
    %115 = tpu.matmul %112, %114, %cst_86 {dimension_numbers = #tpu.dot_dimension_numbers<[2], [1], [1], [2], [0, 0, 0, 1, 1, 2], [0], [0]>} : vector<1x3x16xbf16>, vector<1x16x256xbf16>, vector<1x3x256xf32> -> vector<1x3x256xf32>
    "tpu.trace_stop"() : () -> ()
    %116 = arith.addf %110, %115 : vector<1x3x256xf32>
    %c0_87 = arith.constant 0 : index
    %c0_88 = arith.constant 0 : index
    %c0_89 = arith.constant 0 : index
    %117 = vector.load %arg6[%c0_87, %c0_88, %c0_89] : memref<1x4x1xf32, #tpu.memory_space<vmem>>, vector<1x4x1xf32>
    %118 = vector.extract_strided_slice %117 {offsets = [0, 0, 0], sizes = [1, 1, 1], strides = [1, 1, 1]} : vector<1x4x1xf32> to vector<1x1x1xf32>
    %119 = vector.extract_strided_slice %117 {offsets = [0, 1, 0], sizes = [1, 1, 1], strides = [1, 1, 1]} : vector<1x4x1xf32> to vector<1x1x1xf32>
    %120 = vector.extract_strided_slice %117 {offsets = [0, 2, 0], sizes = [1, 1, 1], strides = [1, 1, 1]} : vector<1x4x1xf32> to vector<1x1x1xf32>
    %121 = vector.extract_strided_slice %117 {offsets = [0, 3, 0], sizes = [1, 1, 1], strides = [1, 1, 1]} : vector<1x4x1xf32> to vector<1x1x1xf32>
    %122 = vector.broadcast %118 : vector<1x1x1xf32> to vector<1x3x256xf32>
    %123 = arith.mulf %116, %122 : vector<1x3x256xf32>
    %cst_90 = arith.constant 0.000000e+00 : f32
    %cst_91 = arith.constant 1.000000e+00 : f32
    %124 = vector.broadcast %cst_90 : f32 to vector<1x3x256xf32>
    %125 = arith.maximumf %124, %123 : vector<1x3x256xf32>
    %126 = vector.broadcast %cst_91 : f32 to vector<1x3x256xf32>
    %127 = arith.minimumf %126, %125 : vector<1x3x256xf32>
    %128 = vector.extract_strided_slice %127 {offsets = [0, 0, 0], sizes = [1, 1, 256], strides = [1, 1, 1]} : vector<1x3x256xf32> to vector<1x1x256xf32>
    %cst_92 = arith.constant 2.990000e-01 : f32
    %129 = vector.broadcast %cst_92 : f32 to vector<1x1x256xf32>
    %130 = arith.mulf %129, %128 : vector<1x1x256xf32>
    %131 = vector.extract_strided_slice %127 {offsets = [0, 1, 0], sizes = [1, 1, 256], strides = [1, 1, 1]} : vector<1x3x256xf32> to vector<1x1x256xf32>
    %cst_93 = arith.constant 5.870000e-01 : f32
    %132 = vector.broadcast %cst_93 : f32 to vector<1x1x256xf32>
    %133 = arith.mulf %132, %131 : vector<1x1x256xf32>
    %134 = arith.addf %130, %133 : vector<1x1x256xf32>
    %135 = vector.extract_strided_slice %127 {offsets = [0, 2, 0], sizes = [1, 1, 256], strides = [1, 1, 1]} : vector<1x3x256xf32> to vector<1x1x256xf32>
    %cst_94 = arith.constant 1.140000e-01 : f32
    %136 = vector.broadcast %cst_94 : f32 to vector<1x1x256xf32>
    %137 = arith.mulf %136, %135 : vector<1x1x256xf32>
    %138 = arith.addf %134, %137 : vector<1x1x256xf32>
    %cst_95 = arith.constant dense<0.000000e+00> : vector<1x1xf32>
    %139 = vector.multi_reduction <add>, %138, %cst_95 [2] : vector<1x1x256xf32> to vector<1x1xf32>
    %140 = vector.shape_cast %139 : vector<1x1xf32> to vector<1x1x1xf32>
    %cst_96 = arith.constant 2.560000e+02 : f32
    %141 = vector.broadcast %cst_96 : f32 to vector<1x1x1xf32>
    %142 = arith.divf %140, %141 : vector<1x1x1xf32>
    %143 = vector.broadcast %142 : vector<1x1x1xf32> to vector<1x3x256xf32>
    %144 = arith.subf %127, %143 : vector<1x3x256xf32>
    %145 = vector.broadcast %119 : vector<1x1x1xf32> to vector<1x3x256xf32>
    %146 = arith.mulf %145, %144 : vector<1x3x256xf32>
    %147 = vector.broadcast %142 : vector<1x1x1xf32> to vector<1x3x256xf32>
    %148 = arith.addf %147, %146 : vector<1x3x256xf32>
    %cst_97 = arith.constant 0.000000e+00 : f32
    %cst_98 = arith.constant 1.000000e+00 : f32
    %149 = vector.broadcast %cst_97 : f32 to vector<1x3x256xf32>
    %150 = arith.maximumf %149, %148 : vector<1x3x256xf32>
    %151 = vector.broadcast %cst_98 : f32 to vector<1x3x256xf32>
    %152 = arith.minimumf %151, %150 : vector<1x3x256xf32>
    %153 = vector.extract_strided_slice %152 {offsets = [0, 0, 0], sizes = [1, 1, 256], strides = [1, 1, 1]} : vector<1x3x256xf32> to vector<1x1x256xf32>
    %cst_99 = arith.constant 2.990000e-01 : f32
    %154 = vector.broadcast %cst_99 : f32 to vector<1x1x256xf32>
    %155 = arith.mulf %154, %153 : vector<1x1x256xf32>
    %156 = vector.extract_strided_slice %152 {offsets = [0, 1, 0], sizes = [1, 1, 256], strides = [1, 1, 1]} : vector<1x3x256xf32> to vector<1x1x256xf32>
    %cst_100 = arith.constant 5.870000e-01 : f32
    %157 = vector.broadcast %cst_100 : f32 to vector<1x1x256xf32>
    %158 = arith.mulf %157, %156 : vector<1x1x256xf32>
    %159 = arith.addf %155, %158 : vector<1x1x256xf32>
    %160 = vector.extract_strided_slice %152 {offsets = [0, 2, 0], sizes = [1, 1, 256], strides = [1, 1, 1]} : vector<1x3x256xf32> to vector<1x1x256xf32>
    %cst_101 = arith.constant 1.140000e-01 : f32
    %161 = vector.broadcast %cst_101 : f32 to vector<1x1x256xf32>
    %162 = arith.mulf %161, %160 : vector<1x1x256xf32>
    %163 = arith.addf %159, %162 : vector<1x1x256xf32>
    %164 = vector.broadcast %163 : vector<1x1x256xf32> to vector<1x3x256xf32>
    %165 = arith.subf %152, %164 : vector<1x3x256xf32>
    %166 = vector.broadcast %120 : vector<1x1x1xf32> to vector<1x3x256xf32>
    %167 = arith.mulf %166, %165 : vector<1x3x256xf32>
    %168 = vector.broadcast %163 : vector<1x1x256xf32> to vector<1x3x256xf32>
    %169 = arith.addf %168, %167 : vector<1x3x256xf32>
    %cst_102 = arith.constant 0.000000e+00 : f32
    %cst_103 = arith.constant 1.000000e+00 : f32
    %170 = vector.broadcast %cst_102 : f32 to vector<1x3x256xf32>
    %171 = arith.maximumf %170, %169 : vector<1x3x256xf32>
    %172 = vector.broadcast %cst_103 : f32 to vector<1x3x256xf32>
    %173 = arith.minimumf %172, %171 : vector<1x3x256xf32>
    %174 = vector.extract_strided_slice %173 {offsets = [0, 0, 0], sizes = [1, 1, 256], strides = [1, 1, 1]} : vector<1x3x256xf32> to vector<1x1x256xf32>
    %cst_104 = arith.constant 2.990000e-01 : f32
    %175 = vector.broadcast %cst_104 : f32 to vector<1x1x256xf32>
    %176 = arith.mulf %175, %174 : vector<1x1x256xf32>
    %177 = vector.extract_strided_slice %173 {offsets = [0, 1, 0], sizes = [1, 1, 256], strides = [1, 1, 1]} : vector<1x3x256xf32> to vector<1x1x256xf32>
    %cst_105 = arith.constant 5.870000e-01 : f32
    %178 = vector.broadcast %cst_105 : f32 to vector<1x1x256xf32>
    %179 = arith.mulf %178, %177 : vector<1x1x256xf32>
    %180 = arith.addf %176, %179 : vector<1x1x256xf32>
    %181 = vector.extract_strided_slice %173 {offsets = [0, 2, 0], sizes = [1, 1, 256], strides = [1, 1, 1]} : vector<1x3x256xf32> to vector<1x1x256xf32>
    %cst_106 = arith.constant 1.140000e-01 : f32
    %182 = vector.broadcast %cst_106 : f32 to vector<1x1x256xf32>
    %183 = arith.mulf %182, %181 : vector<1x1x256xf32>
    %184 = arith.addf %180, %183 : vector<1x1x256xf32>
    %185 = vector.broadcast %121 : vector<1x1x1xf32> to vector<1x1x256xf32>
    %186 = arith.mulf %185, %184 : vector<1x1x256xf32>
    %cst_107 = arith.constant 1.000000e+00 : f32
    %187 = vector.broadcast %cst_107 : f32 to vector<1x1x1xf32>
    %188 = arith.subf %187, %121 : vector<1x1x1xf32>
    %189 = vector.broadcast %188 : vector<1x1x1xf32> to vector<1x3x256xf32>
    %190 = arith.mulf %189, %173 : vector<1x3x256xf32>
    %191 = vector.broadcast %186 : vector<1x1x256xf32> to vector<1x3x256xf32>
    %192 = arith.addf %191, %190 : vector<1x3x256xf32>
    %c0_108 = arith.constant 0 : index
    %c0_109 = arith.constant 0 : index
    %c0_110 = arith.constant 0 : index
    %193 = vector.load %arg7[%c0_108, %c0_109, %c0_110] : memref<2x3x1xf32, #tpu.memory_space<vmem>>, vector<2x3x1xf32>
    %194 = arith.truncf %192 : vector<1x3x256xf32> to vector<1x3x256xbf16>
    %c0_111 = arith.constant 0 : index
    %c0_112 = arith.constant 0 : index
    %c0_113 = arith.constant 0 : index
    %195 = vector.load %arg5[%c0_111, %c0_112, %c0_113] : memref<1x256x256xbf16, #tpu.memory_space<vmem>>, vector<1x256x256xbf16>
    "tpu.trace_start"() <{level = 10 : i32, message = "bcp,bpq->bcq"}> : () -> ()
    %cst_114 = arith.constant dense<0.000000e+00> : vector<1x3x256xf32>
    %196 = tpu.matmul %194, %195, %cst_114 {dimension_numbers = #tpu.dot_dimension_numbers<[2], [1], [1], [2], [0, 0, 0, 1, 1, 2], [0], [0]>} : vector<1x3x256xbf16>, vector<1x256x256xbf16>, vector<1x3x256xf32> -> vector<1x3x256xf32>
    "tpu.trace_stop"() : () -> ()
    %197 = vector.extract_strided_slice %193 {offsets = [0, 0, 0], sizes = [1, 3, 1], strides = [1, 1, 1]} : vector<2x3x1xf32> to vector<1x3x1xf32>
    %198 = vector.broadcast %197 : vector<1x3x1xf32> to vector<1x3x256xf32>
    %199 = arith.subf %196, %198 : vector<1x3x256xf32>
    %200 = vector.extract_strided_slice %193 {offsets = [1, 0, 0], sizes = [1, 3, 1], strides = [1, 1, 1]} : vector<2x3x1xf32> to vector<1x3x1xf32>
    %201 = vector.broadcast %200 : vector<1x3x1xf32> to vector<1x3x256xf32>
    %202 = arith.mulf %199, %201 : vector<1x3x256xf32>
    %c0_115 = arith.constant 0 : index
    %c0_116 = arith.constant 0 : index
    %c0_117 = arith.constant 0 : index
    %203 = vector.load %arg8[%c0_115, %c0_116, %c0_117] : memref<1x3x256xf32, #tpu.memory_space<vmem>>, vector<1x3x256xf32>
    tpu.vector_store %arg8[%c0_115, %c0_116, %c0_117], %202 {strides = array<i32>} : memref<1x3x256xf32, #tpu.memory_space<vmem>>, vector<1x3x256xf32>,
    return
  }
  func.func @transform_0(%arg0: i32) -> (i32, i32, i32, i32) {
    %c0_i32 = arith.constant 0 : i32
    %c0_i32_0 = arith.constant 0 : i32
    %c0_i32_1 = arith.constant 0 : i32
    %c0_i32_2 = arith.constant 0 : i32
    return %arg0, %c0_i32, %c0_i32_0, %c0_i32_1 : i32, i32, i32, i32
  }
  func.func @transform_1(%arg0: i32) -> (i32, i32, i32) {
    %c0_i32 = arith.constant 0 : i32
    %c0_i32_0 = arith.constant 0 : i32
    %c0_i32_1 = arith.constant 0 : i32
    return %arg0, %c0_i32, %c0_i32_0 : i32, i32, i32
  }
  func.func @transform_2(%arg0: i32) -> (i32, i32, i32) {
    %c0_i32 = arith.constant 0 : i32
    %c0_i32_0 = arith.constant 0 : i32
    %c0_i32_1 = arith.constant 0 : i32
    return %arg0, %c0_i32, %c0_i32_0 : i32, i32, i32
  }
  func.func @transform_3(%arg0: i32) -> (i32, i32, i32, i32) {
    %c0_i32 = arith.constant 0 : i32
    %c0_i32_0 = arith.constant 0 : i32
    %c0_i32_1 = arith.constant 0 : i32
    %c0_i32_2 = arith.constant 0 : i32
    return %arg0, %c0_i32, %c0_i32_0, %c0_i32_1 : i32, i32, i32, i32
  }
  func.func @transform_4(%arg0: i32) -> (i32, i32, i32) {
    %c0_i32 = arith.constant 0 : i32
    %c0_i32_0 = arith.constant 0 : i32
    %c0_i32_1 = arith.constant 0 : i32
    return %arg0, %c0_i32, %c0_i32_0 : i32, i32, i32
  }
  func.func @transform_5(%arg0: i32) -> (i32, i32, i32) {
    %c0_i32 = arith.constant 0 : i32
    %c0_i32_0 = arith.constant 0 : i32
    %c0_i32_1 = arith.constant 0 : i32
    return %arg0, %c0_i32, %c0_i32_0 : i32, i32, i32
  }
  func.func @transform_6(%arg0: i32) -> (i32, i32, i32) {
    %c0_i32 = arith.constant 0 : i32
    %c0_i32_0 = arith.constant 0 : i32
    %c0_i32_1 = arith.constant 0 : i32
    %c0_i32_2 = arith.constant 0 : i32
    return %c0_i32, %c0_i32_0, %c0_i32_1 : i32, i32, i32
  }
  func.func @transform_7(%arg0: i32) -> (i32, i32, i32) {
    %c0_i32 = arith.constant 0 : i32
    %c0_i32_0 = arith.constant 0 : i32
    %c0_i32_1 = arith.constant 0 : i32
    return %arg0, %c0_i32, %c0_i32_0 : i32, i32, i32
  }
}

</mosaic_0001>

<llo_original>
// kernel: tpu_custom_call.1
$region0: #{tpu_custom_call.1}
  #allocation0 [shape = 'u32[]', space=smem, size = 0x4, offset = 0x4, fixed_abs, tag = 'smem constant byte address 0x4 - core index']
  #allocation1 [shape = 'u32[144,128]{1,0:T(1,128)}', space=vmem, size = 0x12000, scoped, tag = 'internal scratch']
  %s0 = inlined_call_operand.hbm [shape: bf16[2,3,16,16], index: 0, kind: input, shape index: {}]
  %s1 = inlined_call_operand.vmem [shape: bf16[2,16,16], index: 1, kind: input, shape index: {}]
  %s2 = inlined_call_operand.hbm [shape: bf16[2,16,16], index: 2, kind: input, shape index: {}]
  %s3 = inlined_call_operand.hbm [shape: bf16[2,16,16,256], index: 3, kind: input, shape index: {}]
  %s4 = inlined_call_operand.hbm [shape: bf16[2,256,256], index: 4, kind: input, shape index: {}]
  %s5 = inlined_call_operand.vmem [shape: f32[2,4,1], index: 5, kind: input, shape index: {}]
  %s6 = inlined_call_operand.vmem [shape: f32[2,3,1], index: 6, kind: input, shape index: {}]
  %s7 = inlined_call_operand.vmem [shape: f32[2,3,256], index: 7, kind: output, shape index: {}]
  %s8 = sld [smem:[#allocation0]]
  $region77: #{tpu_custom_call.1} parent=0
    _
  %s10 = ssub.s32 1, %s8
  %s11 = scalar_select 0, %s10, %s8
  $region1: #{tpu_custom_call.1} parent=0
    #allocation2 [shape = 'u8[24576]{0}', space=vmem, size = 0x6000, scoped, tag = 'input window, operand 0']
    #allocation3 [shape = 's32[2]{0}', space=sflag, size = 0x8, scoped, tag = 'scoped memory for tpu_custom_call.1']
    #allocation4 [shape = 'u8[8192]{0}', space=vmem, size = 0x2000, scoped, tag = 'input window, operand 2']
    #allocation5 [shape = 's32[2]{0}', space=sflag, size = 0x8, scoped, tag = 'scoped memory for tpu_custom_call.1']
    #allocation6 [shape = 'u8[262144]{0}', space=vmem, size = 0x40000, scoped, tag = 'input window, operand 3']
    #allocation7 [shape = 'u8[262144]{0}', space=vmem, size = 0x40000, scoped, tag = 'input window, operand 4']
    #allocation8 [shape = 's32[2]{0}', space=sflag, size = 0x8, scoped, tag = 'scoped memory for tpu_custom_call.1']
    %12 = vsyncpa [#allocation3], 0
    %s13 = scalar_lea.sflag [#allocation3], 1
    %14 = vsyncpa %s13, 0
    %15 = vsyncpa [#allocation5], 0
    %s16 = scalar_lea.sflag [#allocation5], 1
    %17 = vsyncpa %s16, 0
    %18 = vsyncpa [#allocation8], 0
    %s19 = scalar_lea.sflag [#allocation8], 1
    %20 = vsyncpa %s19, 0
    loop: start=0, step=1, limit=4
    $region2: #{tpu_custom_call.1} parent=1 // loop_pre_header
      _
    $region3: #{tpu_custom_call.1} parent=1 // loop_header
      %s22 = sphi 0, %s26
      %p23 = scmp.ge.s32.totalorder %s22, 4
      %s32 = sphi 0, %s34
      %s35 = sphi 0, %s32
      %s36 = sphi 0, %s35
      %s52 = sphi 0, %s36
      %s58 = sphi 0, %s60
      %s61 = sphi 0, %s58
      %s62 = sphi 0, %s61
      %s78 = sphi 0, %s62
      %s84 = sphi 0, %s86
      %s87 = sphi 0, %s84
      %s88 = sphi 0, %s87
      %s104 = sphi 0, %s88
      %s110 = sphi 0, %s112
      %s113 = sphi 0, %s110
      %s114 = sphi 0, %s113
      %s130 = sphi 0, %s114
      %s136 = sphi 0, %s138
      %s139 = sphi 0, %s136
      %s140 = sphi 0, %s139
      %s156 = sphi 0, %s140
      %s162 = sphi 0, %s164
      %s165 = sphi 0, %s162
      %s166 = sphi 0, %s165
      %s182 = sphi 0, %s166
      %s186 = sphi 0, %s186
      %s188 = sphi 0, %s186
      %s189 = sphi 0, %s188
      %s203 = sphi 0, %s189
      %s209 = sphi 0, %s211
      %s212 = sphi 0, %s209
      %s213 = sphi 0, %s212
      %s229 = sphi 0, %s213
    $region4: #{tpu_custom_call.1} parent=1 // loop_header_branch
      %25 = sbr.rel (%p23) target = $region8
    $region5: #{tpu_custom_call.1} parent=1 // loop_body
      %s27 = ssub.s32 %s22, 1
      %s28 = ssub.s32 %s22, 2
      %s29 = sadd.s32 %s22, 1
      %s30 = ssub.s32 %s22, %s29
      %p31 = scmp.eq.s32.totalorder %s30, 0
      %s33 = sadd.s32 %s32, 1
      %s34 = scalar_select %p31, %s32, %s33
      %p37 = pneg %p31
      %p38 = scmp.eq.s32.totalorder %s22, 1
      %p39 = por %p37, %p38
      %p40 = scmp.ne.s32.totalorder %s32, %s35
      %p41 = scmp.eq.s32.totalorder %s22, 0
      %p42 = por %p40, %p41
      %p43 = scmp.ne.s32.totalorder %s32, %s35
      %p44 = scmp.eq.s32.totalorder %s27, 1
      %p45 = por %p43, %p44
      %p46 = scmp.ne.s32.totalorder %s35, %s36
      %p47 = scmp.eq.s32.totalorder %s27, 0
      %p48 = por %p46, %p47
      %p49 = scmp.ne.s32.totalorder %s35, %s36
      %p50 = scmp.eq.s32.totalorder %s28, 1
      %p51 = por %p49, %p50
      %p53 = scmp.ne.s32.totalorder %s36, %s52
      %p54 = scmp.eq.s32.totalorder %s28, 0
      %p55 = por %p53, %p54
      %s56 = ssub.s32 %s22, %s29
      %p57 = scmp.eq.s32.totalorder %s56, 0
      %s59 = sadd.s32 %s58, 1
      %s60 = scalar_select %p57, %s58, %s59
      %p63 = pneg %p57
      %p64 = scmp.eq.s32.totalorder %s22, 1
      %p65 = por %p63, %p64
      %p66 = scmp.ne.s32.totalorder %s58, %s61
      %p67 = scmp.eq.s32.totalorder %s22, 0
      %p68 = por %p66, %p67
      %p69 = scmp.ne.s32.totalorder %s58, %s61
      %p70 = scmp.eq.s32.totalorder %s27, 1
      %p71 = por %p69, %p70
      %p72 = scmp.ne.s32.totalorder %s61, %s62
      %p73 = scmp.eq.s32.totalorder %s27, 0
      %p74 = por %p72, %p73
      %p75 = scmp.ne.s32.totalorder %s61, %s62
      %p76 = scmp.eq.s32.totalorder %s28, 1
      %p77 = por %p75, %p76
      %p79 = scmp.ne.s32.totalorder %s62, %s78
      %p80 = scmp.eq.s32.totalorder %s28, 0
      %p81 = por %p79, %p80
      %s82 = ssub.s32 %s22, %s29
      %p83 = scmp.eq.s32.totalorder %s82, 0
      %s85 = sadd.s32 %s84, 1
      %s86 = scalar_select %p83, %s84, %s85
      %p89 = pneg %p83
      %p90 = scmp.eq.s32.totalorder %s22, 1
      %p91 = por %p89, %p90
      %p92 = scmp.ne.s32.totalorder %s84, %s87
      %p93 = scmp.eq.s32.totalorder %s22, 0
      %p94 = por %p92, %p93
      %p95 = scmp.ne.s32.totalorder %s84, %s87
      %p96 = scmp.eq.s32.totalorder %s27, 1
      %p97 = por %p95, %p96
      %p98 = scmp.ne.s32.totalorder %s87, %s88
      %p99 = scmp.eq.s32.totalorder %s27, 0
      %p100 = por %p98, %p99
      %p101 = scmp.ne.s32.totalorder %s87, %s88
      %p102 = scmp.eq.s32.totalorder %s28, 1
      %p103 = por %p101, %p102
      %p105 = scmp.ne.s32.totalorder %s88, %s104
      %p106 = scmp.eq.s32.totalorder %s28, 0
      %p107 = por %p105, %p106
      %s108 = ssub.s32 %s22, %s29
      %p109 = scmp.eq.s32.totalorder %s108, 0
      %s111 = sadd.s32 %s110, 1
      %s112 = scalar_select %p109, %s110, %s111
      %p115 = pneg %p109
      %p116 = scmp.eq.s32.totalorder %s22, 1
      %p117 = por %p115, %p116
      %p118 = scmp.ne.s32.totalorder %s110, %s113
      %p119 = scmp.eq.s32.totalorder %s22, 0
      %p120 = por %p118, %p119
      %p121 = scmp.ne.s32.totalorder %s110, %s113
      %p122 = scmp.eq.s32.totalorder %s27, 1
      %p123 = por %p121, %p122
      %p124 = scmp.ne.s32.totalorder %s113, %s114
      %p125 = scmp.eq.s32.totalorder %s27, 0
      %p126 = por %p124, %p125
      %p127 = scmp.ne.s32.totalorder %s113, %s114
      %p128 = scmp.eq.s32.totalorder %s28, 1
      %p129 = por %p127, %p128
      %p131 = scmp.ne.s32.totalorder %s114, %s130
      %p132 = scmp.eq.s32.totalorder %s28, 0
      %p133 = por %p131, %p132
      %s134 = ssub.s32 %s22, %s29
      %p135 = scmp.eq.s32.totalorder %s134, 0
      %s137 = sadd.s32 %s136, 1
      %s138 = scalar_select %p135, %s136, %s137
      %p141 = pneg %p135
      %p142 = scmp.eq.s32.totalorder %s22, 1
      %p143 = por %p141, %p142
      %p144 = scmp.ne.s32.totalorder %s136, %s139
      %p145 = scmp.eq.s32.totalorder %s22, 0
      %p146 = por %p144, %p145
      %p147 = scmp.ne.s32.totalorder %s136, %s139
      %p148 = scmp.eq.s32.totalorder %s27, 1
      %p149 = por %p147, %p148
      %p150 = scmp.ne.s32.totalorder %s139, %s140
      %p151 = scmp.eq.s32.totalorder %s27, 0
      %p152 = por %p150, %p151
      %p153 = scmp.ne.s32.totalorder %s139, %s140
      %p154 = scmp.eq.s32.totalorder %s28, 1
      %p155 = por %p153, %p154
      %p157 = scmp.ne.s32.totalorder %s140, %s156
      %p158 = scmp.eq.s32.totalorder %s28, 0
      %p159 = por %p157, %p158
      %s160 = ssub.s32 %s22, %s29
      %p161 = scmp.eq.s32.totalorder %s160, 0
      %s163 = sadd.s32 %s162, 1
      %s164 = scalar_select %p161, %s162, %s163
      %p167 = pneg %p161
      %p168 = scmp.eq.s32.totalorder %s22, 1
      %p169 = por %p167, %p168
      %p170 = scmp.ne.s32.totalorder %s162, %s165
      %p171 = scmp.eq.s32.totalorder %s22, 0
      %p172 = por %p170, %p171
      %p173 = scmp.ne.s32.totalorder %s162, %s165
      %p174 = scmp.eq.s32.totalorder %s27, 1
      %p175 = por %p173, %p174
      %p176 = scmp.ne.s32.totalorder %s165, %s166
      %p177 = scmp.eq.s32.totalorder %s27, 0
      %p178 = por %p176, %p177
      %p179 = scmp.ne.s32.totalorder %s165, %s166
      %p180 = scmp.eq.s32.totalorder %s28, 1
      %p181 = por %p179, %p180
      %p183 = scmp.ne.s32.totalorder %s166, %s182
      %p184 = scmp.eq.s32.totalorder %s28, 0
      %p185 = por %p183, %p184
      %s187 = sadd.s32 %s186, 1
      %p190 = scmp.eq.s32.totalorder %s22, 1
      %p191 = scmp.ne.s32.totalorder %s186, %s188
      %p192 = scmp.eq.s32.totalorder %s22, 0
      %p193 = por %p191, %p192
      %p194 = scmp.ne.s32.totalorder %s186, %s188
      %p195 = scmp.eq.s32.totalorder %s27, 1
      %p196 = por %p194, %p195
      %p197 = scmp.ne.s32.totalorder %s188, %s189
      %p198 = scmp.eq.s32.totalorder %s27, 0
      %p199 = por %p197, %p198
      %p200 = scmp.ne.s32.totalorder %s188, %s189
      %p201 = scmp.eq.s32.totalorder %s28, 1
      %p202 = por %p200, %p201
      %p204 = scmp.ne.s32.totalorder %s189, %s203
      %p205 = scmp.eq.s32.totalorder %s28, 0
      %p206 = por %p204, %p205
      %s207 = ssub.s32 %s22, %s29
      %p208 = scmp.eq.s32.totalorder %s207, 0
      %s210 = sadd.s32 %s209, 1
      %s211 = scalar_select %p208, %s209, %s210
      %p214 = pneg %p208
      %p215 = scmp.eq.s32.totalorder %s22, 1
      %p216 = por %p214, %p215
      %p217 = scmp.ne.s32.totalorder %s209, %s212
      %p218 = scmp.eq.s32.totalorder %s22, 0
      %p219 = por %p217, %p218
      %p220 = scmp.ne.s32.totalorder %s209, %s212
      %p221 = scmp.eq.s32.totalorder %s27, 1
      %p222 = por %p220, %p221
      %p223 = scmp.ne.s32.totalorder %s212, %s213
      %p224 = scmp.eq.s32.totalorder %s27, 0
      %p225 = por %p223, %p224
      %p226 = scmp.ne.s32.totalorder %s212, %s213
      %p227 = scmp.eq.s32.totalorder %s28, 1
      %p228 = por %p226, %p227
      %p230 = scmp.ne.s32.totalorder %s213, %s229
      %p231 = scmp.eq.s32.totalorder %s28, 0
      %p232 = por %p230, %p231
      %p233 = scmp.le.s32.totalorder 1, %s22
      %p234 = scmp.lt.s32.totalorder %s22, 3
      %p235 = pnand %p233, %p234
      %p236 = pneg %p235
      // Predicated region
      $region9: #{tpu_custom_call.1} parent=5 // pred_check
        _
      $region10: #{tpu_custom_call.1} parent=5 // pred_check_branch
        %238 = sbr.rel (%p235) target = $region12
      $region11: #{tpu_custom_call.1} parent=5 // pred_region
        %s239 = ssub.s32 %s22, 1
        // Predicated region
        $region13: #{tpu_custom_call.1} parent=11 // pred_check
          %p240 = pneg %p199
        $region14: #{tpu_custom_call.1} parent=11 // pred_check_branch
          %242 = sbr.rel (%p240) target = $region16
        $region15: #{tpu_custom_call.1} parent=11 // pred_region
          _
        $region16: #{tpu_custom_call.1} parent=11 // pred_fallthru
          _
      $region12: #{tpu_custom_call.1} parent=5 // pred_fallthru
        _
      %p243 = scmp.lt.s32.totalorder %s22, 2
      // Predicated region
      $region17: #{tpu_custom_call.1} parent=5 // pred_check
        %p244 = pneg %p243
      $region18: #{tpu_custom_call.1} parent=5 // pred_check_branch
        %246 = sbr.rel (%p244) target = $region20
      $region19: #{tpu_custom_call.1} parent=5 // pred_region
        // Predicated region
        $region21: #{tpu_custom_call.1} parent=19 // pred_check
          %p247 = pneg %p42
        $region22: #{tpu_custom_call.1} parent=19 // pred_check_branch
          %249 = sbr.rel (%p247) target = $region24
        $region23: #{tpu_custom_call.1} parent=19 // pred_region
          %s250 = sand.u32 %s32, 1
          %s251 = scalar_lea.sflag [#allocation3], %s250
          %s252 = sand.u32 %s32, 1
          %s253 = smul.addr %s252, 24
          %s254 = scalar_lea.vmem [#allocation2], %s253
          %s256 = ssub.s32 384, 384
          %257 = vsyncadd %s251, %s256
          %s258 = smul.addr %s22, 6
          %s259 = smul.addr %s258, 64
          %s260 = scalar_lea.hbm %s0, %s259
          %s261 = sshll.u32 %s254, 4
          %s262 = int_to_ptr.vmem [resolvable:$true] %s261
          %267 = dma.hbm_to_vmem [thread:$0]  %s260, 384, %s262, %s251, 64, 64, 4
        $region24: #{tpu_custom_call.1} parent=19 // pred_fallthru
          _
        // Predicated region
        $region25: #{tpu_custom_call.1} parent=19 // pred_check
          %p268 = pneg %p68
        $region26: #{tpu_custom_call.1} parent=19 // pred_check_branch
          %270 = sbr.rel (%p268) target = $region28
        $region27: #{tpu_custom_call.1} parent=19 // pred_region
          %p271 = scmp.lt.s32.totalorder %s22, 1
          %s272 = scalar_select %p271, %s22, 1
          %s273 = smul.addr %s272, 2
          %s274 = smul.addr %s273, 4
          %s275 = scalar_lea.vmem %s1, %s274
        $region28: #{tpu_custom_call.1} parent=19 // pred_fallthru
          _
        // Predicated region
        $region29: #{tpu_custom_call.1} parent=19 // pred_check
          %p276 = pneg %p94
        $region30: #{tpu_custom_call.1} parent=19 // pred_check_branch
          %278 = sbr.rel (%p276) target = $region32
        $region31: #{tpu_custom_call.1} parent=19 // pred_region
          %s279 = sand.u32 %s22, 1
          %s280 = scalar_lea.sflag [#allocation5], %s279
          %s281 = sand.u32 %s84, 1
          %s282 = smul.addr %s281, 8
          %s283 = scalar_lea.vmem [#allocation4], %s282
          %s285 = ssub.s32 128, 128
          %286 = vsyncadd %s280, %s285
          %s287 = smul.addr %s22, 2
          %s288 = smul.addr %s287, 64
          %s289 = scalar_lea.hbm %s2, %s288
          %s290 = sshll.u32 %s283, 4
          %s291 = int_to_ptr.vmem [resolvable:$true] %s290
          %296 = dma.hbm_to_vmem [thread:$0]  %s289, 128, %s291, %s280, 64, 64, 4
        $region32: #{tpu_custom_call.1} parent=19 // pred_fallthru
          _
        // Predicated region
        $region33: #{tpu_custom_call.1} parent=19 // pred_check
          %p297 = pneg %p120
        $region34: #{tpu_custom_call.1} parent=19 // pred_check_branch
          %299 = sbr.rel (%p297) target = $region36
        $region35: #{tpu_custom_call.1} parent=19 // pred_region
          %s300 = sand.u32 %s22, 1
          %s301 = scalar_lea.sflag [#allocation5], %s300
          %s302 = sand.u32 %s110, 1
          %s303 = smul.addr %s302, 256
          %s304 = scalar_lea.vmem [#allocation6], %s303
          %s306 = ssub.s32 4096, 4096
          %307 = vsyncadd %s301, %s306
          %s308 = smul.addr %s22, 64
          %s309 = smul.addr %s308, 64
          %s310 = scalar_lea.hbm %s3, %s309
          %s311 = sshll.u32 %s304, 4
          %s312 = int_to_ptr.vmem [resolvable:$true] %s311
          %317 = dma.hbm_to_vmem [thread:$0]  %s310, 4096, %s312, %s301, 128, 128, 8
        $region36: #{tpu_custom_call.1} parent=19 // pred_fallthru
          _
        // Predicated region
        $region37: #{tpu_custom_call.1} parent=19 // pred_check
          %p318 = pneg %p146
        $region38: #{tpu_custom_call.1} parent=19 // pred_check_branch
          %320 = sbr.rel (%p318) target = $region40
        $region39: #{tpu_custom_call.1} parent=19 // pred_region
          %s321 = sand.u32 %s136, 1
          %s322 = scalar_lea.sflag [#allocation8], %s321
          %s323 = sand.u32 %s136, 1
          %s324 = smul.addr %s323, 256
          %s325 = scalar_lea.vmem [#allocation7], %s324
          %s327 = ssub.s32 4096, 4096
          %328 = vsyncadd %s322, %s327
          %s329 = smul.addr %s22, 64
          %s330 = smul.addr %s329, 64
          %s331 = scalar_lea.hbm %s4, %s330
          %s332 = sshll.u32 %s325, 4
          %s333 = int_to_ptr.vmem [resolvable:$true] %s332
          %338 = dma.hbm_to_vmem [thread:$0]  %s331, 4096, %s333, %s322, 128, 128, 8
        $region40: #{tpu_custom_call.1} parent=19 // pred_fallthru
          _
        // Predicated region
        $region41: #{tpu_custom_call.1} parent=19 // pred_check
          %p339 = pneg %p172
        $region42: #{tpu_custom_call.1} parent=19 // pred_check_branch
          %341 = sbr.rel (%p339) target = $region44
        $region43: #{tpu_custom_call.1} parent=19 // pred_region
          %p342 = scmp.lt.s32.totalorder %s22, 1
          %s343 = scalar_select %p342, %s22, 1
          %s344 = smul.addr %s343, 4
          %s345 = scalar_lea.vmem %s5, %s344
        $region44: #{tpu_custom_call.1} parent=19 // pred_fallthru
          _
      $region20: #{tpu_custom_call.1} parent=5 // pred_fallthru
        _
      %p346 = scmp.le.s32.totalorder 1, %s22
      %p347 = scmp.lt.s32.totalorder %s22, 3
      %p348 = pnand %p346, %p347
      %p349 = pneg %p348
      // Predicated region
      $region45: #{tpu_custom_call.1} parent=5 // pred_check
        _
      $region46: #{tpu_custom_call.1} parent=5 // pred_check_branch
        %351 = sbr.rel (%p348) target = $region48
      $region47: #{tpu_custom_call.1} parent=5 // pred_region
        %s352 = ssub.s32 %s22, 1
        %s353 = sand.u32 %s35, 1
        %s354 = scalar_lea.sflag [#allocation3], %s353
        %s355 = sand.u32 %s35, 1
        %s356 = smul.addr %s355, 24
        %s357 = scalar_lea.vmem [#allocation2], %s356
        // Predicated region
        $region49: #{tpu_custom_call.1} parent=47 // pred_check
          %p358 = pneg %p48
        $region50: #{tpu_custom_call.1} parent=47 // pred_check_branch
          %360 = sbr.rel (%p358) target = $region52
        $region51: #{tpu_custom_call.1} parent=47 // pred_region
          %361 = dma.done %s354, 384
        $region52: #{tpu_custom_call.1} parent=47 // pred_fallthru
          _
        %s362 = sand.u32 %s27, 1
        %s363 = scalar_lea.sflag [#allocation5], %s362
        %s364 = sand.u32 %s87, 1
        %s365 = smul.addr %s364, 8
        %s366 = scalar_lea.vmem [#allocation4], %s365
        // Predicated region
        $region53: #{tpu_custom_call.1} parent=47 // pred_check
          %p367 = pneg %p100
        $region54: #{tpu_custom_call.1} parent=47 // pred_check_branch
          %369 = sbr.rel (%p367) target = $region56
        $region55: #{tpu_custom_call.1} parent=47 // pred_region
          %370 = dma.done %s363, 128
        $region56: #{tpu_custom_call.1} parent=47 // pred_fallthru
          _
        %s371 = sand.u32 %s27, 1
        %s372 = scalar_lea.sflag [#allocation5], %s371
        %s373 = sand.u32 %s113, 1
        %s374 = smul.addr %s373, 256
        %s375 = scalar_lea.vmem [#allocation6], %s374
        // Predicated region
        $region57: #{tpu_custom_call.1} parent=47 // pred_check
          %p376 = pneg %p126
        $region58: #{tpu_custom_call.1} parent=47 // pred_check_branch
          %378 = sbr.rel (%p376) target = $region60
        $region59: #{tpu_custom_call.1} parent=47 // pred_region
          %379 = dma.done %s372, 4096
        $region60: #{tpu_custom_call.1} parent=47 // pred_fallthru
          _
        %s380 = sand.u32 %s139, 1
        %s381 = scalar_lea.sflag [#allocation8], %s380
        %s382 = sand.u32 %s139, 1
        %s383 = smul.addr %s382, 256
        %s384 = scalar_lea.vmem [#allocation7], %s383
        // Predicated region
        $region61: #{tpu_custom_call.1} parent=47 // pred_check
          %p385 = pneg %p152
        $region62: #{tpu_custom_call.1} parent=47 // pred_check_branch
          %387 = sbr.rel (%p385) target = $region64
        $region63: #{tpu_custom_call.1} parent=47 // pred_region
          %388 = dma.done %s381, 4096
        $region64: #{tpu_custom_call.1} parent=47 // pred_fallthru
          _
        %s389 = sand.u32 %s35, 1
        %s390 = scalar_lea.sflag [#allocation3], %s389
        %s391 = sand.u32 %s35, 1
        %s392 = smul.addr %s391, 24
        %s393 = scalar_lea.vmem [#allocation2], %s392
        %p394 = pneg %p48
        %p395 = pneg %p45
        %p396 = scmp.lt.s32.totalorder %s27, 1
        %s397 = scalar_select %p396, %s27, 1
        %s398 = smul.addr %s397, 2
        %s399 = smul.addr %s398, 4
        %s400 = scalar_lea.vmem %s1, %s399
        %p401 = pneg %p74
        %p402 = pneg %p71
        %s403 = sand.u32 %s27, 1
        %s404 = scalar_lea.sflag [#allocation5], %s403
        %s405 = sand.u32 %s87, 1
        %s406 = smul.addr %s405, 8
        %s407 = scalar_lea.vmem [#allocation4], %s406
        %p408 = pneg %p100
        %p409 = pneg %p97
        %s410 = sand.u32 %s27, 1
        %s411 = scalar_lea.sflag [#allocation5], %s410
        %s412 = sand.u32 %s113, 1
        %s413 = smul.addr %s412, 256
        %s414 = scalar_lea.vmem [#allocation6], %s413
        %p415 = pneg %p126
        %p416 = pneg %p123
        %s417 = sand.u32 %s139, 1
        %s418 = scalar_lea.sflag [#allocation8], %s417
        %s419 = sand.u32 %s139, 1
        %s420 = smul.addr %s419, 256
        %s421 = scalar_lea.vmem [#allocation7], %s420
        %p422 = pneg %p152
        %p423 = pneg %p149
        %p424 = scmp.lt.s32.totalorder %s27, 1
        %s425 = scalar_select %p424, %s27, 1
        %s426 = smul.addr %s425, 4
        %s427 = scalar_lea.vmem %s5, %s426
        %p428 = pneg %p178
        %p429 = pneg %p175
        %p430 = pneg %p199
        %p431 = pneg %p196
        %p432 = pneg %p225
        %p433 = pneg %p222
        %p434 = scmp.lt.s32.totalorder %s27, 1
        %s435 = scalar_select %p434, %s27, 1
        %s436 = smul.addr %s435, 2
        %s437 = smul.addr %s436, 4
        %s438 = scalar_lea.vmem %s7, %s437
        %p439 = scmp.lt.s32.totalorder %s27, 1
        %s440 = scalar_select %p439, %s27, 1
        %s441 = smul.addr %s440, 2
        %s442 = smul.addr %s441, 4
        %s443 = scalar_lea.vmem %s1, %s442
        %p444 = scmp.lt.s32.totalorder %s27, 1
        %s445 = scalar_select %p444, %s27, 1
        %s446 = smul.addr %s445, 4
        %s447 = scalar_lea.vmem %s5, %s446
        %p448 = scmp.lt.s32.totalorder %s27, 1
        %s449 = scalar_select %p448, %s27, 1
        %s450 = smul.addr %s449, 2
        %s451 = smul.addr %s450, 4
        %s452 = scalar_lea.vmem %s7, %s451
        %v454 = vld [vmem:[%s443] sm:$0xf]
        %v455 = vld [vmem:[%s443 + $0x4] sm:$0xf]
        %v456 = vld [vmem:[%s366] sm:$0xf]
        %v457 = vld [vmem:[%s366 + $0x4] sm:$0xf]
        %v458 = vld [vmem:[%s357] sm:$0xf]
        %v459 = vld [vmem:[%s357 + $0x4] sm:$0xf]
        %v462 = vunpack.c.l.b16 %v458
        %v463 = vunpack.c.l.b16 %v459
        %v464 = vpack.c.b16 %v463, %v462
        %v467 = vunpack.c.l.b16 %v456
        %v468 = vunpack.c.l.b16 %v457
        %v469 = vpack.c.b16 %v468, %v467
        %vm471 = vcmask 130048
        %v473 = vsel %vm471, %v464, 0
        %475 = vmatprep.subr.bf16.mxu0 0
        %476 = vmatpush1.bf16.msra.mxu0 %v469
        %477 = vmatprep.subr.bf16.mxu0 0
        %478 = vmatpush1.bf16.msra.mxu0 0
        %479 = vmatprep.subr.bf16.mxu0 0
        %480 = vmatpush1.bf16.msra.mxu0 0
        %481 = vmatprep.subr.bf16.mxu0 0
        %482 = vmatpush1.bf16.msra.mxu0 0
        %483 = vmatprep.subr.bf16.mxu0 0
        %484 = vmatpush1.bf16.msra.mxu0 0
        %485 = vmatprep.subr.bf16.mxu0 0
        %486 = vmatpush1.bf16.msra.mxu0 0
        %487 = vmatprep.subr.bf16.mxu0 0
        %488 = vmatpush1.bf16.msra.mxu0 0
        %489 = vmatprep.subr.bf16.mxu0 0
        %490 = vmatpush1.bf16.msra.mxu0 0
        %491 = vmatprep.subr.bf16.mxu0 0
        %492 = vmatpush1.bf16.msra.mxu0 0
        %493 = vmatprep.subr.bf16.mxu0 0
        %494 = vmatpush1.bf16.msra.mxu0 0
        %495 = vmatprep.subr.bf16.mxu0 0
        %496 = vmatpush1.bf16.msra.mxu0 0
        %497 = vmatprep.subr.bf16.mxu0 0
        %498 = vmatpush1.bf16.msra.mxu0 0
        %499 = vmatprep.subr.bf16.mxu0 0
        %500 = vmatpush1.bf16.msra.mxu0 0
        %501 = vmatprep.subr.bf16.mxu0 0
        %502 = vmatpush1.bf16.msra.mxu0 0
        %503 = vmatprep.subr.bf16.mxu0 0
        %504 = vmatpush1.bf16.msra.mxu0 0
        %505 = vmatprep.subr.bf16.mxu0 0
        %506 = vmatpush1.bf16.msra.mxu0 0
        %507 = vmatprep.mubr.bf16.mxu0 0
        %508 = vmatmul.mubr.bf16.gmra.mrb[0].mxu0 %v473
        %v509 = vpop.f32.mrb[0].mxu0
        %v510 = vadd.f32 0.0, %v509
        %v511 = vpop.f32.mrb[0].mxu0
        %v512 = vpop.f32.mrb[0].mxu0
        %v513 = vadd.f32 0.0, %v512
        %v514 = vpop.f32.mrb[0].mxu0
        %515 = vdwg.mxu0
        %v516 = vpack.c.bf16 %v513, %v510
        %v519 = vunpack.c.l.b16 %v454
        %v520 = vunpack.c.l.b16 %v455
        %v521 = vpack.c.b16 %v520, %v519
        %v523 = vsel %vm471, %v521, 0
        %525 = vmatprep.subr.bf16.mxu0 0
        %526 = vmatpush1.bf16.msra.mxu0 %v516
        %527 = vmatprep.subr.bf16.mxu0 0
        %528 = vmatpush1.bf16.msra.mxu0 0
        %529 = vmatprep.subr.bf16.mxu0 0
        %530 = vmatpush1.bf16.msra.mxu0 0
        %531 = vmatprep.subr.bf16.mxu0 0
        %532 = vmatpush1.bf16.msra.mxu0 0
        %533 = vmatprep.subr.bf16.mxu0 0
        %534 = vmatpush1.bf16.msra.mxu0 0
        %535 = vmatprep.subr.bf16.mxu0 0
        %536 = vmatpush1.bf16.msra.mxu0 0
        %537 = vmatprep.subr.bf16.mxu0 0
        %538 = vmatpush1.bf16.msra.mxu0 0
        %539 = vmatprep.subr.bf16.mxu0 0
        %540 = vmatpush1.bf16.msra.mxu0 0
        %541 = vmatprep.subr.bf16.mxu0 0
        %542 = vmatpush1.bf16.msra.mxu0 0
        %543 = vmatprep.subr.bf16.mxu0 0
        %544 = vmatpush1.bf16.msra.mxu0 0
        %545 = vmatprep.subr.bf16.mxu0 0
        %546 = vmatpush1.bf16.msra.mxu0 0
        %547 = vmatprep.subr.bf16.mxu0 0
        %548 = vmatpush1.bf16.msra.mxu0 0
        %549 = vmatprep.subr.bf16.mxu0 0
        %550 = vmatpush1.bf16.msra.mxu0 0
        %551 = vmatprep.subr.bf16.mxu0 0
        %552 = vmatpush1.bf16.msra.mxu0 0
        %553 = vmatprep.subr.bf16.mxu0 0
        %554 = vmatpush1.bf16.msra.mxu0 0
        %555 = vmatprep.subr.bf16.mxu0 0
        %556 = vmatpush1.bf16.msra.mxu0 0
        %557 = vmatprep.mubr.bf16.mxu0 0
        %558 = vmatmul.mubr.bf16.gmra.mrb[0].mxu0 %v523
        %v559 = vpop.f32.mrb[0].mxu0
        %v560 = vadd.f32 0.0, %v559
        %v561 = vpop.f32.mrb[0].mxu0
        %v562 = vpop.f32.mrb[0].mxu0
        %v563 = vadd.f32 0.0, %v562
        %v564 = vpop.f32.mrb[0].mxu0
        %565 = vdwg.mxu0
        %s566 = scalar_lea.vmem %s357, 8 [#allocation2]
        %v567 = vld [vmem:[%s566] sm:$0xf]
        %v568 = vld [vmem:[%s566 + $0x4] sm:$0xf]
        %v571 = vunpack.c.l.b16 %v567
        %v572 = vunpack.c.l.b16 %v568
        %v573 = vpack.c.b16 %v572, %v571
        %v575 = vsel %vm471, %v573, 0
        %577 = vmatprep.subr.bf16.mxu0 0
        %578 = vmatpush1.bf16.msra.mxu0 %v469
        %579 = vmatprep.subr.bf16.mxu0 0
        %580 = vmatpush1.bf16.msra.mxu0 0
        %581 = vmatprep.subr.bf16.mxu0 0
        %582 = vmatpush1.bf16.msra.mxu0 0
        %583 = vmatprep.subr.bf16.mxu0 0
        %584 = vmatpush1.bf16.msra.mxu0 0
        %585 = vmatprep.subr.bf16.mxu0 0
        %586 = vmatpush1.bf16.msra.mxu0 0
        %587 = vmatprep.subr.bf16.mxu0 0
        %588 = vmatpush1.bf16.msra.mxu0 0
        %589 = vmatprep.subr.bf16.mxu0 0
        %590 = vmatpush1.bf16.msra.mxu0 0
        %591 = vmatprep.subr.bf16.mxu0 0
        %592 = vmatpush1.bf16.msra.mxu0 0
        %593 = vmatprep.subr.bf16.mxu0 0
        %594 = vmatpush1.bf16.msra.mxu0 0
        %595 = vmatprep.subr.bf16.mxu0 0
        %596 = vmatpush1.bf16.msra.mxu0 0
        %597 = vmatprep.subr.bf16.mxu0 0
        %598 = vmatpush1.bf16.msra.mxu0 0
        %599 = vmatprep.subr.bf16.mxu0 0
        %600 = vmatpush1.bf16.msra.mxu0 0
        %601 = vmatprep.subr.bf16.mxu0 0
        %602 = vmatpush1.bf16.msra.mxu0 0
        %603 = vmatprep.subr.bf16.mxu0 0
        %604 = vmatpush1.bf16.msra.mxu0 0
        %605 = vmatprep.subr.bf16.mxu0 0
        %606 = vmatpush1.bf16.msra.mxu0 0
        %607 = vmatprep.subr.bf16.mxu0 0
        %608 = vmatpush1.bf16.msra.mxu0 0
        %609 = vmatprep.mubr.bf16.mxu0 0
        %610 = vmatmul.mubr.bf16.gmra.mrb[0].mxu0 %v575
        %v611 = vpop.f32.mrb[0].mxu0
        %v612 = vadd.f32 0.0, %v611
        %v613 = vpop.f32.mrb[0].mxu0
        %v614 = vpop.f32.mrb[0].mxu0
        %v615 = vadd.f32 0.0, %v614
        %v616 = vpop.f32.mrb[0].mxu0
        %617 = vdwg.mxu0
        %v618 = vpack.c.bf16 %v615, %v612
        %619 = vmatprep.subr.bf16.mxu0 0
        %620 = vmatpush1.bf16.msra.mxu0 %v618
        %621 = vmatprep.subr.bf16.mxu0 0
        %622 = vmatpush1.bf16.msra.mxu0 0
        %623 = vmatprep.subr.bf16.mxu0 0
        %624 = vmatpush1.bf16.msra.mxu0 0
        %625 = vmatprep.subr.bf16.mxu0 0
        %626 = vmatpush1.bf16.msra.mxu0 0
        %627 = vmatprep.subr.bf16.mxu0 0
        %628 = vmatpush1.bf16.msra.mxu0 0
        %629 = vmatprep.subr.bf16.mxu0 0
        %630 = vmatpush1.bf16.msra.mxu0 0
        %631 = vmatprep.subr.bf16.mxu0 0
        %632 = vmatpush1.bf16.msra.mxu0 0
        %633 = vmatprep.subr.bf16.mxu0 0
        %634 = vmatpush1.bf16.msra.mxu0 0
        %635 = vmatprep.subr.bf16.mxu0 0
        %636 = vmatpush1.bf16.msra.mxu0 0
        %637 = vmatprep.subr.bf16.mxu0 0
        %638 = vmatpush1.bf16.msra.mxu0 0
        %639 = vmatprep.subr.bf16.mxu0 0
        %640 = vmatpush1.bf16.msra.mxu0 0
        %641 = vmatprep.subr.bf16.mxu0 0
        %642 = vmatpush1.bf16.msra.mxu0 0
        %643 = vmatprep.subr.bf16.mxu0 0
        %644 = vmatpush1.bf16.msra.mxu0 0
        %645 = vmatprep.subr.bf16.mxu0 0
        %646 = vmatpush1.bf16.msra.mxu0 0
        %647 = vmatprep.subr.bf16.mxu0 0
        %648 = vmatpush1.bf16.msra.mxu0 0
        %649 = vmatprep.subr.bf16.mxu0 0
        %650 = vmatpush1.bf16.msra.mxu0 0
        %651 = vmatprep.mubr.bf16.mxu0 0
        %652 = vmatmul.mubr.bf16.gmra.mrb[0].mxu0 %v523
        %v653 = vpop.f32.mrb[0].mxu0
        %v654 = vadd.f32 0.0, %v653
        %v655 = vpop.f32.mrb[0].mxu0
        %v656 = vpop.f32.mrb[0].mxu0
        %v657 = vadd.f32 0.0, %v656
        %v658 = vpop.f32.mrb[0].mxu0
        %659 = vdwg.mxu0
        %s660 = scalar_lea.vmem %s357, 16 [#allocation2]
        %v661 = vld [vmem:[%s660] sm:$0xf]
        %v662 = vld [vmem:[%s660 + $0x4] sm:$0xf]
        %v665 = vunpack.c.l.b16 %v661
        %v666 = vunpack.c.l.b16 %v662
        %v667 = vpack.c.b16 %v666, %v665
        %v669 = vsel %vm471, %v667, 0
        %671 = vmatprep.subr.bf16.mxu0 0
        %672 = vmatpush1.bf16.msra.mxu0 %v469
        %673 = vmatprep.subr.bf16.mxu0 0
        %674 = vmatpush1.bf16.msra.mxu0 0
        %675 = vmatprep.subr.bf16.mxu0 0
        %676 = vmatpush1.bf16.msra.mxu0 0
        %677 = vmatprep.subr.bf16.mxu0 0
        %678 = vmatpush1.bf16.msra.mxu0 0
        %679 = vmatprep.subr.bf16.mxu0 0
        %680 = vmatpush1.bf16.msra.mxu0 0
        %681 = vmatprep.subr.bf16.mxu0 0
        %682 = vmatpush1.bf16.msra.mxu0 0
        %683 = vmatprep.subr.bf16.mxu0 0
        %684 = vmatpush1.bf16.msra.mxu0 0
        %685 = vmatprep.subr.bf16.mxu0 0
        %686 = vmatpush1.bf16.msra.mxu0 0
        %687 = vmatprep.subr.bf16.mxu0 0
        %688 = vmatpush1.bf16.msra.mxu0 0
        %689 = vmatprep.subr.bf16.mxu0 0
        %690 = vmatpush1.bf16.msra.mxu0 0
        %691 = vmatprep.subr.bf16.mxu0 0
        %692 = vmatpush1.bf16.msra.mxu0 0
        %693 = vmatprep.subr.bf16.mxu0 0
        %694 = vmatpush1.bf16.msra.mxu0 0
        %695 = vmatprep.subr.bf16.mxu0 0
        %696 = vmatpush1.bf16.msra.mxu0 0
        %697 = vmatprep.subr.bf16.mxu0 0
        %698 = vmatpush1.bf16.msra.mxu0 0
        %699 = vmatprep.subr.bf16.mxu0 0
        %700 = vmatpush1.bf16.msra.mxu0 0
        %701 = vmatprep.subr.bf16.mxu0 0
        %702 = vmatpush1.bf16.msra.mxu0 0
        %703 = vmatprep.mubr.bf16.mxu0 0
        %704 = vmatmul.mubr.bf16.gmra.mrb[0].mxu0 %v669
        %v705 = vpop.f32.mrb[0].mxu0
        %v706 = vadd.f32 0.0, %v705
        %v707 = vpop.f32.mrb[0].mxu0
        %v708 = vpop.f32.mrb[0].mxu0
        %v709 = vadd.f32 0.0, %v708
        %v710 = vpop.f32.mrb[0].mxu0
        %711 = vdwg.mxu0
        %v712 = vpack.c.bf16 %v709, %v706
        %713 = vmatprep.subr.bf16.mxu0 0
        %714 = vmatpush1.bf16.msra.mxu0 %v712
        %715 = vmatprep.subr.bf16.mxu0 0
        %716 = vmatpush1.bf16.msra.mxu0 0
        %717 = vmatprep.subr.bf16.mxu0 0
        %718 = vmatpush1.bf16.msra.mxu0 0
        %719 = vmatprep.subr.bf16.mxu0 0
        %720 = vmatpush1.bf16.msra.mxu0 0
        %721 = vmatprep.subr.bf16.mxu0 0
        %722 = vmatpush1.bf16.msra.mxu0 0
        %723 = vmatprep.subr.bf16.mxu0 0
        %724 = vmatpush1.bf16.msra.mxu0 0
        %725 = vmatprep.subr.bf16.mxu0 0
        %726 = vmatpush1.bf16.msra.mxu0 0
        %727 = vmatprep.subr.bf16.mxu0 0
        %728 = vmatpush1.bf16.msra.mxu0 0
        %729 = vmatprep.subr.bf16.mxu0 0
        %730 = vmatpush1.bf16.msra.mxu0 0
        %731 = vmatprep.subr.bf16.mxu0 0
        %732 = vmatpush1.bf16.msra.mxu0 0
        %733 = vmatprep.subr.bf16.mxu0 0
        %734 = vmatpush1.bf16.msra.mxu0 0
        %735 = vmatprep.subr.bf16.mxu0 0
        %736 = vmatpush1.bf16.msra.mxu0 0
        %737 = vmatprep.subr.bf16.mxu0 0
        %738 = vmatpush1.bf16.msra.mxu0 0
        %739 = vmatprep.subr.bf16.mxu0 0
        %740 = vmatpush1.bf16.msra.mxu0 0
        %741 = vmatprep.subr.bf16.mxu0 0
        %742 = vmatpush1.bf16.msra.mxu0 0
        %743 = vmatprep.subr.bf16.mxu0 0
        %744 = vmatpush1.bf16.msra.mxu0 0
        %745 = vmatprep.mubr.bf16.mxu0 0
        %746 = vmatmul.mubr.bf16.gmra.mrb[0].mxu0 %v523
        %v747 = vpop.f32.mrb[0].mxu0
        %v748 = vadd.f32 0.0, %v747
        %v749 = vpop.f32.mrb[0].mxu0
        %v750 = vpop.f32.mrb[0].mxu0
        %v751 = vadd.f32 0.0, %v750
        %v752 = vpop.f32.mrb[0].mxu0
        %753 = vdwg.mxu0
        %v754 = vpack.c.bf16 %v563, %v560
        %v755 = vpack.c.bf16 %v657, %v654
        %v756 = vpack.c.bf16 %v751, %v748
        %v757 = vld [vmem:[%s375] sm:$0xff]
        %v758 = vld [vmem:[%s375 + $0x8] sm:$0xff]
        %s759 = scalar_lea.vmem %s375, 16 [#allocation6]
        %v760 = vld [vmem:[%s759] sm:$0xff]
        %v761 = vld [vmem:[%s759 + $0x8] sm:$0xff]
        %v765 = vunpack.c.l.b16 %v754
        %v766 = vunpack.c.l.b16 %v755
        %v767 = vunpack.c.l.b16 %v756
        %v768 = vrot.slane %v765, 1
        %vm769 = vcmask 1041409
        %v770 = vsel %vm769, %v766, %v768
        %v771 = vrot.slane %v767, 7
        %vm772 = vcmask 1042434
        %v773 = vsel %vm772, %v771, %v770
        %v774 = vpack.c.b16 %v773, %v773
        %v777 = vunpack.c.l.b16 %v760
        %v778 = vunpack.c.h.b16 %v760
        %v779 = vunpack.c.l.b16 %v761
        %v780 = vunpack.c.h.b16 %v761
        %v781 = vpack.c.b16 %v779, %v777
        %v782 = vpack.c.b16 %v780, %v778
        %v786 = vsel %vm471, %v774, 0
        %788 = vmatprep.subr.bf16.mxu0 %v782
        %789 = vmatpush1.bf16.msra.mxu0 %v781
        %790 = vmatprep.subr.bf16.mxu0 0
        %791 = vmatpush1.bf16.msra.mxu0 0
        %792 = vmatprep.subr.bf16.mxu0 0
        %793 = vmatpush1.bf16.msra.mxu0 0
        %794 = vmatprep.subr.bf16.mxu0 0
        %795 = vmatpush1.bf16.msra.mxu0 0
        %796 = vmatprep.subr.bf16.mxu0 0
        %797 = vmatpush1.bf16.msra.mxu0 0
        %798 = vmatprep.subr.bf16.mxu0 0
        %799 = vmatpush1.bf16.msra.mxu0 0
        %800 = vmatprep.subr.bf16.mxu0 0
        %801 = vmatpush1.bf16.msra.mxu0 0
        %802 = vmatprep.subr.bf16.mxu0 0
        %803 = vmatpush1.bf16.msra.mxu0 0
        %804 = vmatprep.subr.bf16.mxu0 0
        %805 = vmatpush1.bf16.msra.mxu0 0
        %806 = vmatprep.subr.bf16.mxu0 0
        %807 = vmatpush1.bf16.msra.mxu0 0
        %808 = vmatprep.subr.bf16.mxu0 0
        %809 = vmatpush1.bf16.msra.mxu0 0
        %810 = vmatprep.subr.bf16.mxu0 0
        %811 = vmatpush1.bf16.msra.mxu0 0
        %812 = vmatprep.subr.bf16.mxu0 0
        %813 = vmatpush1.bf16.msra.mxu0 0
        %814 = vmatprep.subr.bf16.mxu0 0
        %815 = vmatpush1.bf16.msra.mxu0 0
        %816 = vmatprep.subr.bf16.mxu0 0
        %817 = vmatpush1.bf16.msra.mxu0 0
        %818 = vmatprep.subr.bf16.mxu0 0
        %819 = vmatpush1.bf16.msra.mxu0 0
        %820 = vmatprep.mubr.bf16.mxu0 0
        %821 = vmatmul.mubr.bf16.gmra.mrb[0].mxu0 %v786
        %v822 = vpop.f32.mrb[0].mxu0
        %v823 = vadd.f32 0.0, %v822
        %v824 = vpop.f32.mrb[0].mxu0
        %v825 = vadd.f32 0.0, %v824
        %v826 = vpop.f32.mrb[0].mxu0
        %v827 = vpop.f32.mrb[0].mxu0
        %828 = vdwg.mxu0
        %v829 = vrot.slane %v766, 7
        %v830 = vsel %vm769, %v829, %v765
        %v831 = vrot.slane %v767, 6
        %v832 = vsel %vm772, %v831, %v830
        %v833 = vpack.c.b16 %v832, %v832
        %v836 = vunpack.c.l.b16 %v757
        %v837 = vunpack.c.h.b16 %v757
        %v838 = vunpack.c.l.b16 %v758
        %v839 = vunpack.c.h.b16 %v758
        %v840 = vpack.c.b16 %v838, %v836
        %v841 = vpack.c.b16 %v839, %v837
        %v845 = vsel %vm471, %v833, 0
        %847 = vmatprep.subr.bf16.mxu0 %v841
        %848 = vmatpush1.bf16.msra.mxu0 %v840
        %849 = vmatprep.subr.bf16.mxu0 0
        %850 = vmatpush1.bf16.msra.mxu0 0
        %851 = vmatprep.subr.bf16.mxu0 0
        %852 = vmatpush1.bf16.msra.mxu0 0
        %853 = vmatprep.subr.bf16.mxu0 0
        %854 = vmatpush1.bf16.msra.mxu0 0
        %855 = vmatprep.subr.bf16.mxu0 0
        %856 = vmatpush1.bf16.msra.mxu0 0
        %857 = vmatprep.subr.bf16.mxu0 0
        %858 = vmatpush1.bf16.msra.mxu0 0
        %859 = vmatprep.subr.bf16.mxu0 0
        %860 = vmatpush1.bf16.msra.mxu0 0
        %861 = vmatprep.subr.bf16.mxu0 0
        %862 = vmatpush1.bf16.msra.mxu0 0
        %863 = vmatprep.subr.bf16.mxu0 0
        %864 = vmatpush1.bf16.msra.mxu0 0
        %865 = vmatprep.subr.bf16.mxu0 0
        %866 = vmatpush1.bf16.msra.mxu0 0
        %867 = vmatprep.subr.bf16.mxu0 0
        %868 = vmatpush1.bf16.msra.mxu0 0
        %869 = vmatprep.subr.bf16.mxu0 0
        %870 = vmatpush1.bf16.msra.mxu0 0
        %871 = vmatprep.subr.bf16.mxu0 0
        %872 = vmatpush1.bf16.msra.mxu0 0
        %873 = vmatprep.subr.bf16.mxu0 0
        %874 = vmatpush1.bf16.msra.mxu0 0
        %875 = vmatprep.subr.bf16.mxu0 0
        %876 = vmatpush1.bf16.msra.mxu0 0
        %877 = vmatprep.subr.bf16.mxu0 0
        %878 = vmatpush1.bf16.msra.mxu0 0
        %879 = vmatprep.mubr.bf16.mxu0 0
        %880 = vmatmul.mubr.bf16.gmra.mrb[0].mxu0 %v845
        %v881 = vpop.f32.mrb[0].mxu0
        %v882 = vadd.f32 %v823, %v881
        %v883 = vpop.f32.mrb[0].mxu0
        %v884 = vadd.f32 %v825, %v883
        %v885 = vpop.f32.mrb[0].mxu0
        %v886 = vpop.f32.mrb[0].mxu0
        %887 = vdwg.mxu0
        %s888 = scalar_lea.vmem %s375, 32 [#allocation6]
        %v889 = vld [vmem:[%s888] sm:$0xff]
        %v890 = vld [vmem:[%s888 + $0x8] sm:$0xff]
        %v891 = vrot.slane %v765, 2
        %v892 = vrot.slane %v766, 1
        %v893 = vsel %vm769, %v892, %v891
        %v894 = vsel %vm772, %v767, %v893
        %v895 = vpack.c.b16 %v894, %v894
        %v898 = vunpack.c.l.b16 %v889
        %v899 = vunpack.c.h.b16 %v889
        %v900 = vunpack.c.l.b16 %v890
        %v901 = vunpack.c.h.b16 %v890
        %v902 = vpack.c.b16 %v900, %v898
        %v903 = vpack.c.b16 %v901, %v899
        %v907 = vsel %vm471, %v895, 0
        %909 = vmatprep.subr.bf16.mxu0 %v903
        %910 = vmatpush1.bf16.msra.mxu0 %v902
        %911 = vmatprep.subr.bf16.mxu0 0
        %912 = vmatpush1.bf16.msra.mxu0 0
        %913 = vmatprep.subr.bf16.mxu0 0
        %914 = vmatpush1.bf16.msra.mxu0 0
        %915 = vmatprep.subr.bf16.mxu0 0
        %916 = vmatpush1.bf16.msra.mxu0 0
        %917 = vmatprep.subr.bf16.mxu0 0
        %918 = vmatpush1.bf16.msra.mxu0 0
        %919 = vmatprep.subr.bf16.mxu0 0
        %920 = vmatpush1.bf16.msra.mxu0 0
        %921 = vmatprep.subr.bf16.mxu0 0
        %922 = vmatpush1.bf16.msra.mxu0 0
        %923 = vmatprep.subr.bf16.mxu0 0
        %924 = vmatpush1.bf16.msra.mxu0 0
        %925 = vmatprep.subr.bf16.mxu0 0
        %926 = vmatpush1.bf16.msra.mxu0 0
        %927 = vmatprep.subr.bf16.mxu0 0
        %928 = vmatpush1.bf16.msra.mxu0 0
        %929 = vmatprep.subr.bf16.mxu0 0
        %930 = vmatpush1.bf16.msra.mxu0 0
        %931 = vmatprep.subr.bf16.mxu0 0
        %932 = vmatpush1.bf16.msra.mxu0 0
        %933 = vmatprep.subr.bf16.mxu0 0
        %934 = vmatpush1.bf16.msra.mxu0 0
        %935 = vmatprep.subr.bf16.mxu0 0
        %936 = vmatpush1.bf16.msra.mxu0 0
        %937 = vmatprep.subr.bf16.mxu0 0
        %938 = vmatpush1.bf16.msra.mxu0 0
        %939 = vmatprep.subr.bf16.mxu0 0
        %940 = vmatpush1.bf16.msra.mxu0 0
        %941 = vmatprep.mubr.bf16.mxu0 0
        %942 = vmatmul.mubr.bf16.gmra.mrb[0].mxu0 %v907
        %v943 = vpop.f32.mrb[0].mxu0
        %v944 = vadd.f32 0.0, %v943
        %v945 = vpop.f32.mrb[0].mxu0
        %v946 = vadd.f32 0.0, %v945
        %v947 = vpop.f32.mrb[0].mxu0
        %v948 = vpop.f32.mrb[0].mxu0
        %949 = vdwg.mxu0
        %v950 = vadd.f32 %v882, %v944
        %v951 = vadd.f32 %v884, %v946
        %s952 = scalar_lea.vmem %s375, 48 [#allocation6]
        %v953 = vld [vmem:[%s952] sm:$0xff]
        %v954 = vld [vmem:[%s952 + $0x8] sm:$0xff]
        %v955 = vrot.slane %v765, 3
        %v956 = vrot.slane %v766, 2
        %v957 = vsel %vm769, %v956, %v955
        %v958 = vrot.slane %v767, 1
        %v959 = vsel %vm772, %v958, %v957
        %v960 = vpack.c.b16 %v959, %v959
        %v963 = vunpack.c.l.b16 %v953
        %v964 = vunpack.c.h.b16 %v953
        %v965 = vunpack.c.l.b16 %v954
        %v966 = vunpack.c.h.b16 %v954
        %v967 = vpack.c.b16 %v965, %v963
        %v968 = vpack.c.b16 %v966, %v964
        %v972 = vsel %vm471, %v960, 0
        %974 = vmatprep.subr.bf16.mxu0 %v968
        %975 = vmatpush1.bf16.msra.mxu0 %v967
        %976 = vmatprep.subr.bf16.mxu0 0
        %977 = vmatpush1.bf16.msra.mxu0 0
        %978 = vmatprep.subr.bf16.mxu0 0
        %979 = vmatpush1.bf16.msra.mxu0 0
        %980 = vmatprep.subr.bf16.mxu0 0
        %981 = vmatpush1.bf16.msra.mxu0 0
        %982 = vmatprep.subr.bf16.mxu0 0
        %983 = vmatpush1.bf16.msra.mxu0 0
        %984 = vmatprep.subr.bf16.mxu0 0
        %985 = vmatpush1.bf16.msra.mxu0 0
        %986 = vmatprep.subr.bf16.mxu0 0
        %987 = vmatpush1.bf16.msra.mxu0 0
        %988 = vmatprep.subr.bf16.mxu0 0
        %989 = vmatpush1.bf16.msra.mxu0 0
        %990 = vmatprep.subr.bf16.mxu0 0
        %991 = vmatpush1.bf16.msra.mxu0 0
        %992 = vmatprep.subr.bf16.mxu0 0
        %993 = vmatpush1.bf16.msra.mxu0 0
        %994 = vmatprep.subr.bf16.mxu0 0
        %995 = vmatpush1.bf16.msra.mxu0 0
        %996 = vmatprep.subr.bf16.mxu0 0
        %997 = vmatpush1.bf16.msra.mxu0 0
        %998 = vmatprep.subr.bf16.mxu0 0
        %999 = vmatpush1.bf16.msra.mxu0 0
        %1000 = vmatprep.subr.bf16.mxu0 0
        %1001 = vmatpush1.bf16.msra.mxu0 0
        %1002 = vmatprep.subr.bf16.mxu0 0
        %1003 = vmatpush1.bf16.msra.mxu0 0
        %1004 = vmatprep.subr.bf16.mxu0 0
        %1005 = vmatpush1.bf16.msra.mxu0 0
        %1006 = vmatprep.mubr.bf16.mxu0 0
        %1007 = vmatmul.mubr.bf16.gmra.mrb[0].mxu0 %v972
        %v1008 = vpop.f32.mrb[0].mxu0
        %v1009 = vadd.f32 0.0, %v1008
        %v1010 = vpop.f32.mrb[0].mxu0
        %v1011 = vadd.f32 0.0, %v1010
        %v1012 = vpop.f32.mrb[0].mxu0
        %v1013 = vpop.f32.mrb[0].mxu0
        %1014 = vdwg.mxu0
        %v1015 = vadd.f32 %v950, %v1009
        %v1016 = vadd.f32 %v951, %v1011
        %s1017 = scalar_lea.vmem %s375, 64 [#allocation6]
        %v1018 = vld [vmem:[%s1017] sm:$0xff]
        %v1019 = vld [vmem:[%s1017 + $0x8] sm:$0xff]
        %v1020 = vrot.slane %v765, 4
        %v1021 = vrot.slane %v766, 3
        %v1022 = vsel %vm769, %v1021, %v1020
        %v1023 = vrot.slane %v767, 2
        %v1024 = vsel %vm772, %v1023, %v1022
        %v1025 = vpack.c.b16 %v1024, %v1024
        %v1028 = vunpack.c.l.b16 %v1018
        %v1029 = vunpack.c.h.b16 %v1018
        %v1030 = vunpack.c.l.b16 %v1019
        %v1031 = vunpack.c.h.b16 %v1019
        %v1032 = vpack.c.b16 %v1030, %v1028
        %v1033 = vpack.c.b16 %v1031, %v1029
        %v1037 = vsel %vm471, %v1025, 0
        %1039 = vmatprep.subr.bf16.mxu0 %v1033
        %1040 = vmatpush1.bf16.msra.mxu0 %v1032
        %1041 = vmatprep.subr.bf16.mxu0 0
        %1042 = vmatpush1.bf16.msra.mxu0 0
        %1043 = vmatprep.subr.bf16.mxu0 0
        %1044 = vmatpush1.bf16.msra.mxu0 0
        %1045 = vmatprep.subr.bf16.mxu0 0
        %1046 = vmatpush1.bf16.msra.mxu0 0
        %1047 = vmatprep.subr.bf16.mxu0 0
        %1048 = vmatpush1.bf16.msra.mxu0 0
        %1049 = vmatprep.subr.bf16.mxu0 0
        %1050 = vmatpush1.bf16.msra.mxu0 0
        %1051 = vmatprep.subr.bf16.mxu0 0
        %1052 = vmatpush1.bf16.msra.mxu0 0
        %1053 = vmatprep.subr.bf16.mxu0 0
        %1054 = vmatpush1.bf16.msra.mxu0 0
        %1055 = vmatprep.subr.bf16.mxu0 0
        %1056 = vmatpush1.bf16.msra.mxu0 0
        %1057 = vmatprep.subr.bf16.mxu0 0
        %1058 = vmatpush1.bf16.msra.mxu0 0
        %1059 = vmatprep.subr.bf16.mxu0 0
        %1060 = vmatpush1.bf16.msra.mxu0 0
        %1061 = vmatprep.subr.bf16.mxu0 0
        %1062 = vmatpush1.bf16.msra.mxu0 0
        %1063 = vmatprep.subr.bf16.mxu0 0
        %1064 = vmatpush1.bf16.msra.mxu0 0
        %1065 = vmatprep.subr.bf16.mxu0 0
        %1066 = vmatpush1.bf16.msra.mxu0 0
        %1067 = vmatprep.subr.bf16.mxu0 0
        %1068 = vmatpush1.bf16.msra.mxu0 0
        %1069 = vmatprep.subr.bf16.mxu0 0
        %1070 = vmatpush1.bf16.msra.mxu0 0
        %1071 = vmatprep.mubr.bf16.mxu0 0
        %1072 = vmatmul.mubr.bf16.gmra.mrb[0].mxu0 %v1037
        %v1073 = vpop.f32.mrb[0].mxu0
        %v1074 = vadd.f32 0.0, %v1073
        %v1075 = vpop.f32.mrb[0].mxu0
        %v1076 = vadd.f32 0.0, %v1075
        %v1077 = vpop.f32.mrb[0].mxu0
        %v1078 = vpop.f32.mrb[0].mxu0
        %1079 = vdwg.mxu0
        %v1080 = vadd.f32 %v1015, %v1074
        %v1081 = vadd.f32 %v1016, %v1076
        %s1082 = scalar_lea.vmem %s375, 80 [#allocation6]
        %v1083 = vld [vmem:[%s1082] sm:$0xff]
        %v1084 = vld [vmem:[%s1082 + $0x8] sm:$0xff]
        %v1085 = vrot.slane %v765, 5
        %v1086 = vrot.slane %v766, 4
        %v1087 = vsel %vm769, %v1086, %v1085
        %v1088 = vrot.slane %v767, 3
        %v1089 = vsel %vm772, %v1088, %v1087
        %v1090 = vpack.c.b16 %v1089, %v1089
        %v1093 = vunpack.c.l.b16 %v1083
        %v1094 = vunpack.c.h.b16 %v1083
        %v1095 = vunpack.c.l.b16 %v1084
        %v1096 = vunpack.c.h.b16 %v1084
        %v1097 = vpack.c.b16 %v1095, %v1093
        %v1098 = vpack.c.b16 %v1096, %v1094
        %v1102 = vsel %vm471, %v1090, 0
        %1104 = vmatprep.subr.bf16.mxu0 %v1098
        %1105 = vmatpush1.bf16.msra.mxu0 %v1097
        %1106 = vmatprep.subr.bf16.mxu0 0
        %1107 = vmatpush1.bf16.msra.mxu0 0
        %1108 = vmatprep.subr.bf16.mxu0 0
        %1109 = vmatpush1.bf16.msra.mxu0 0
        %1110 = vmatprep.subr.bf16.mxu0 0
        %1111 = vmatpush1.bf16.msra.mxu0 0
        %1112 = vmatprep.subr.bf16.mxu0 0
        %1113 = vmatpush1.bf16.msra.mxu0 0
        %1114 = vmatprep.subr.bf16.mxu0 0
        %1115 = vmatpush1.bf16.msra.mxu0 0
        %1116 = vmatprep.subr.bf16.mxu0 0
        %1117 = vmatpush1.bf16.msra.mxu0 0
        %1118 = vmatprep.subr.bf16.mxu0 0
        %1119 = vmatpush1.bf16.msra.mxu0 0
        %1120 = vmatprep.subr.bf16.mxu0 0
        %1121 = vmatpush1.bf16.msra.mxu0 0
        %1122 = vmatprep.subr.bf16.mxu0 0
        %1123 = vmatpush1.bf16.msra.mxu0 0
        %1124 = vmatprep.subr.bf16.mxu0 0
        %1125 = vmatpush1.bf16.msra.mxu0 0
        %1126 = vmatprep.subr.bf16.mxu0 0
        %1127 = vmatpush1.bf16.msra.mxu0 0
        %1128 = vmatprep.subr.bf16.mxu0 0
        %1129 = vmatpush1.bf16.msra.mxu0 0
        %1130 = vmatprep.subr.bf16.mxu0 0
        %1131 = vmatpush1.bf16.msra.mxu0 0
        %1132 = vmatprep.subr.bf16.mxu0 0
        %1133 = vmatpush1.bf16.msra.mxu0 0
        %1134 = vmatprep.subr.bf16.mxu0 0
        %1135 = vmatpush1.bf16.msra.mxu0 0
        %1136 = vmatprep.mubr.bf16.mxu0 0
        %1137 = vmatmul.mubr.bf16.gmra.mrb[0].mxu0 %v1102
        %v1138 = vpop.f32.mrb[0].mxu0
        %v1139 = vadd.f32 0.0, %v1138
        %v1140 = vpop.f32.mrb[0].mxu0
        %v1141 = vadd.f32 0.0, %v1140
        %v1142 = vpop.f32.mrb[0].mxu0
        %v1143 = vpop.f32.mrb[0].mxu0
        %1144 = vdwg.mxu0
        %v1145 = vadd.f32 %v1080, %v1139
        %v1146 = vadd.f32 %v1081, %v1141
        %s1147 = scalar_lea.vmem %s375, 96 [#allocation6]
        %v1148 = vld [vmem:[%s1147] sm:$0xff]
        %v1149 = vld [vmem:[%s1147 + $0x8] sm:$0xff]
        %v1150 = vrot.slane %v765, 6
        %v1151 = vrot.slane %v766, 5
        %v1152 = vsel %vm769, %v1151, %v1150
        %v1153 = vrot.slane %v767, 4
        %v1154 = vsel %vm772, %v1153, %v1152
        %v1155 = vpack.c.b16 %v1154, %v1154
        %v1158 = vunpack.c.l.b16 %v1148
        %v1159 = vunpack.c.h.b16 %v1148
        %v1160 = vunpack.c.l.b16 %v1149
        %v1161 = vunpack.c.h.b16 %v1149
        %v1162 = vpack.c.b16 %v1160, %v1158
        %v1163 = vpack.c.b16 %v1161, %v1159
        %v1167 = vsel %vm471, %v1155, 0
        %1169 = vmatprep.subr.bf16.mxu0 %v1163
        %1170 = vmatpush1.bf16.msra.mxu0 %v1162
        %1171 = vmatprep.subr.bf16.mxu0 0
        %1172 = vmatpush1.bf16.msra.mxu0 0
        %1173 = vmatprep.subr.bf16.mxu0 0
        %1174 = vmatpush1.bf16.msra.mxu0 0
        %1175 = vmatprep.subr.bf16.mxu0 0
        %1176 = vmatpush1.bf16.msra.mxu0 0
        %1177 = vmatprep.subr.bf16.mxu0 0
        %1178 = vmatpush1.bf16.msra.mxu0 0
        %1179 = vmatprep.subr.bf16.mxu0 0
        %1180 = vmatpush1.bf16.msra.mxu0 0
        %1181 = vmatprep.subr.bf16.mxu0 0
        %1182 = vmatpush1.bf16.msra.mxu0 0
        %1183 = vmatprep.subr.bf16.mxu0 0
        %1184 = vmatpush1.bf16.msra.mxu0 0
        %1185 = vmatprep.subr.bf16.mxu0 0
        %1186 = vmatpush1.bf16.msra.mxu0 0
        %1187 = vmatprep.subr.bf16.mxu0 0
        %1188 = vmatpush1.bf16.msra.mxu0 0
        %1189 = vmatprep.subr.bf16.mxu0 0
        %1190 = vmatpush1.bf16.msra.mxu0 0
        %1191 = vmatprep.subr.bf16.mxu0 0
        %1192 = vmatpush1.bf16.msra.mxu0 0
        %1193 = vmatprep.subr.bf16.mxu0 0
        %1194 = vmatpush1.bf16.msra.mxu0 0
        %1195 = vmatprep.subr.bf16.mxu0 0
        %1196 = vmatpush1.bf16.msra.mxu0 0
        %1197 = vmatprep.subr.bf16.mxu0 0
        %1198 = vmatpush1.bf16.msra.mxu0 0
        %1199 = vmatprep.subr.bf16.mxu0 0
        %1200 = vmatpush1.bf16.msra.mxu0 0
        %1201 = vmatprep.mubr.bf16.mxu0 0
        %1202 = vmatmul.mubr.bf16.gmra.mrb[0].mxu0 %v1167
        %v1203 = vpop.f32.mrb[0].mxu0
        %v1204 = vadd.f32 0.0, %v1203
        %v1205 = vpop.f32.mrb[0].mxu0
        %v1206 = vadd.f32 0.0, %v1205
        %v1207 = vpop.f32.mrb[0].mxu0
        %v1208 = vpop.f32.mrb[0].mxu0
        %1209 = vdwg.mxu0
        %v1210 = vadd.f32 %v1145, %v1204
        %v1211 = vadd.f32 %v1146, %v1206
        %s1212 = scalar_lea.vmem %s375, 112 [#allocation6]
        %v1213 = vld [vmem:[%s1212] sm:$0xff]
        %v1214 = vld [vmem:[%s1212 + $0x8] sm:$0xff]
        %v1215 = vrot.slane %v765, 7
        %v1216 = vrot.slane %v766, 6
        %v1217 = vsel %vm769, %v1216, %v1215
        %v1218 = vrot.slane %v767, 5
        %v1219 = vsel %vm772, %v1218, %v1217
        %v1220 = vpack.c.b16 %v1219, %v1219
        %v1223 = vunpack.c.l.b16 %v1213
        %v1224 = vunpack.c.h.b16 %v1213
        %v1225 = vunpack.c.l.b16 %v1214
        %v1226 = vunpack.c.h.b16 %v1214
        %v1227 = vpack.c.b16 %v1225, %v1223
        %v1228 = vpack.c.b16 %v1226, %v1224
        %v1232 = vsel %vm471, %v1220, 0
        %1234 = vmatprep.subr.bf16.mxu0 %v1228
        %1235 = vmatpush1.bf16.msra.mxu0 %v1227
        %1236 = vmatprep.subr.bf16.mxu0 0
        %1237 = vmatpush1.bf16.msra.mxu0 0
        %1238 = vmatprep.subr.bf16.mxu0 0
        %1239 = vmatpush1.bf16.msra.mxu0 0
        %1240 = vmatprep.subr.bf16.mxu0 0
        %1241 = vmatpush1.bf16.msra.mxu0 0
        %1242 = vmatprep.subr.bf16.mxu0 0
        %1243 = vmatpush1.bf16.msra.mxu0 0
        %1244 = vmatprep.subr.bf16.mxu0 0
        %1245 = vmatpush1.bf16.msra.mxu0 0
        %1246 = vmatprep.subr.bf16.mxu0 0
        %1247 = vmatpush1.bf16.msra.mxu0 0
        %1248 = vmatprep.subr.bf16.mxu0 0
        %1249 = vmatpush1.bf16.msra.mxu0 0
        %1250 = vmatprep.subr.bf16.mxu0 0
        %1251 = vmatpush1.bf16.msra.mxu0 0
        %1252 = vmatprep.subr.bf16.mxu0 0
        %1253 = vmatpush1.bf16.msra.mxu0 0
        %1254 = vmatprep.subr.bf16.mxu0 0
        %1255 = vmatpush1.bf16.msra.mxu0 0
        %1256 = vmatprep.subr.bf16.mxu0 0
        %1257 = vmatpush1.bf16.msra.mxu0 0
        %1258 = vmatprep.subr.bf16.mxu0 0
        %1259 = vmatpush1.bf16.msra.mxu0 0
        %1260 = vmatprep.subr.bf16.mxu0 0
        %1261 = vmatpush1.bf16.msra.mxu0 0
        %1262 = vmatprep.subr.bf16.mxu0 0
        %1263 = vmatpush1.bf16.msra.mxu0 0
        %1264 = vmatprep.subr.bf16.mxu0 0
        %1265 = vmatpush1.bf16.msra.mxu0 0
        %1266 = vmatprep.mubr.bf16.mxu0 0
        %1267 = vmatmul.mubr.bf16.gmra.mrb[0].mxu0 %v1232
        %v1268 = vpop.f32.mrb[0].mxu0
        %v1269 = vadd.f32 0.0, %v1268
        %v1270 = vpop.f32.mrb[0].mxu0
        %v1271 = vadd.f32 0.0, %v1270
        %v1272 = vpop.f32.mrb[0].mxu0
        %v1273 = vpop.f32.mrb[0].mxu0
        %1274 = vdwg.mxu0
        %v1275 = vadd.f32 %v1210, %v1269
        %v1276 = vadd.f32 %v1211, %v1271
        %s1277 = scalar_lea.vmem %s375, 128 [#allocation6]
        %v1278 = vld [vmem:[%s1277] sm:$0xff]
        %v1279 = vld [vmem:[%s1277 + $0x8] sm:$0xff]
        %v1280 = vunpack.c.h.b16 %v754
        %v1281 = vunpack.c.h.b16 %v755
        %v1282 = vunpack.c.h.b16 %v756
        %v1283 = vrot.slane %v1281, 7
        %v1284 = vsel %vm769, %v1283, %v1280
        %v1285 = vrot.slane %v1282, 6
        %v1286 = vsel %vm772, %v1285, %v1284
        %v1287 = vpack.c.b16 %v1286, %v1286
        %v1290 = vunpack.c.l.b16 %v1278
        %v1291 = vunpack.c.h.b16 %v1278
        %v1292 = vunpack.c.l.b16 %v1279
        %v1293 = vunpack.c.h.b16 %v1279
        %v1294 = vpack.c.b16 %v1292, %v1290
        %v1295 = vpack.c.b16 %v1293, %v1291
        %v1299 = vsel %vm471, %v1287, 0
        %1301 = vmatprep.subr.bf16.mxu0 %v1295
        %1302 = vmatpush1.bf16.msra.mxu0 %v1294
        %1303 = vmatprep.subr.bf16.mxu0 0
        %1304 = vmatpush1.bf16.msra.mxu0 0
        %1305 = vmatprep.subr.bf16.mxu0 0
        %1306 = vmatpush1.bf16.msra.mxu0 0
        %1307 = vmatprep.subr.bf16.mxu0 0
        %1308 = vmatpush1.bf16.msra.mxu0 0
        %1309 = vmatprep.subr.bf16.mxu0 0
        %1310 = vmatpush1.bf16.msra.mxu0 0
        %1311 = vmatprep.subr.bf16.mxu0 0
        %1312 = vmatpush1.bf16.msra.mxu0 0
        %1313 = vmatprep.subr.bf16.mxu0 0
        %1314 = vmatpush1.bf16.msra.mxu0 0
        %1315 = vmatprep.subr.bf16.mxu0 0
        %1316 = vmatpush1.bf16.msra.mxu0 0
        %1317 = vmatprep.subr.bf16.mxu0 0
        %1318 = vmatpush1.bf16.msra.mxu0 0
        %1319 = vmatprep.subr.bf16.mxu0 0
        %1320 = vmatpush1.bf16.msra.mxu0 0
        %1321 = vmatprep.subr.bf16.mxu0 0
        %1322 = vmatpush1.bf16.msra.mxu0 0
        %1323 = vmatprep.subr.bf16.mxu0 0
        %1324 = vmatpush1.bf16.msra.mxu0 0
        %1325 = vmatprep.subr.bf16.mxu0 0
        %1326 = vmatpush1.bf16.msra.mxu0 0
        %1327 = vmatprep.subr.bf16.mxu0 0
        %1328 = vmatpush1.bf16.msra.mxu0 0
        %1329 = vmatprep.subr.bf16.mxu0 0
        %1330 = vmatpush1.bf16.msra.mxu0 0
        %1331 = vmatprep.subr.bf16.mxu0 0
        %1332 = vmatpush1.bf16.msra.mxu0 0
        %1333 = vmatprep.mubr.bf16.mxu0 0
        %1334 = vmatmul.mubr.bf16.gmra.mrb[0].mxu0 %v1299
        %v1335 = vpop.f32.mrb[0].mxu0
        %v1336 = vadd.f32 0.0, %v1335
        %v1337 = vpop.f32.mrb[0].mxu0
        %v1338 = vadd.f32 0.0, %v1337
        %v1339 = vpop.f32.mrb[0].mxu0
        %v1340 = vpop.f32.mrb[0].mxu0
        %1341 = vdwg.mxu0
        %v1342 = vadd.f32 %v1275, %v1336
        %v1343 = vadd.f32 %v1276, %v1338
        %s1344 = scalar_lea.vmem %s375, 144 [#allocation6]
        %v1345 = vld [vmem:[%s1344] sm:$0xff]
        %v1346 = vld [vmem:[%s1344 + $0x8] sm:$0xff]
        %v1347 = vrot.slane %v1280, 1
        %v1348 = vsel %vm769, %v1281, %v1347
        %v1349 = vrot.slane %v1282, 7
        %v1350 = vsel %vm772, %v1349, %v1348
        %v1351 = vpack.c.b16 %v1350, %v1350
        %v1354 = vunpack.c.l.b16 %v1345
        %v1355 = vunpack.c.h.b16 %v1345
        %v1356 = vunpack.c.l.b16 %v1346
        %v1357 = vunpack.c.h.b16 %v1346
        %v1358 = vpack.c.b16 %v1356, %v1354
        %v1359 = vpack.c.b16 %v1357, %v1355
        %v1363 = vsel %vm471, %v1351, 0
        %1365 = vmatprep.subr.bf16.mxu0 %v1359
        %1366 = vmatpush1.bf16.msra.mxu0 %v1358
        %1367 = vmatprep.subr.bf16.mxu0 0
        %1368 = vmatpush1.bf16.msra.mxu0 0
        %1369 = vmatprep.subr.bf16.mxu0 0
        %1370 = vmatpush1.bf16.msra.mxu0 0
        %1371 = vmatprep.subr.bf16.mxu0 0
        %1372 = vmatpush1.bf16.msra.mxu0 0
        %1373 = vmatprep.subr.bf16.mxu0 0
        %1374 = vmatpush1.bf16.msra.mxu0 0
        %1375 = vmatprep.subr.bf16.mxu0 0
        %1376 = vmatpush1.bf16.msra.mxu0 0
        %1377 = vmatprep.subr.bf16.mxu0 0
        %1378 = vmatpush1.bf16.msra.mxu0 0
        %1379 = vmatprep.subr.bf16.mxu0 0
        %1380 = vmatpush1.bf16.msra.mxu0 0
        %1381 = vmatprep.subr.bf16.mxu0 0
        %1382 = vmatpush1.bf16.msra.mxu0 0
        %1383 = vmatprep.subr.bf16.mxu0 0
        %1384 = vmatpush1.bf16.msra.mxu0 0
        %1385 = vmatprep.subr.bf16.mxu0 0
        %1386 = vmatpush1.bf16.msra.mxu0 0
        %1387 = vmatprep.subr.bf16.mxu0 0
        %1388 = vmatpush1.bf16.msra.mxu0 0
        %1389 = vmatprep.subr.bf16.mxu0 0
        %1390 = vmatpush1.bf16.msra.mxu0 0
        %1391 = vmatprep.subr.bf16.mxu0 0
        %1392 = vmatpush1.bf16.msra.mxu0 0
        %1393 = vmatprep.subr.bf16.mxu0 0
        %1394 = vmatpush1.bf16.msra.mxu0 0
        %1395 = vmatprep.subr.bf16.mxu0 0
        %1396 = vmatpush1.bf16.msra.mxu0 0
        %1397 = vmatprep.mubr.bf16.mxu0 0
        %1398 = vmatmul.mubr.bf16.gmra.mrb[0].mxu0 %v1363
        %v1399 = vpop.f32.mrb[0].mxu0
        %v1400 = vadd.f32 0.0, %v1399
        %v1401 = vpop.f32.mrb[0].mxu0
        %v1402 = vadd.f32 0.0, %v1401
        %v1403 = vpop.f32.mrb[0].mxu0
        %v1404 = vpop.f32.mrb[0].mxu0
        %1405 = vdwg.mxu0
        %v1406 = vadd.f32 %v1342, %v1400
        %v1407 = vadd.f32 %v1343, %v1402
        %s1408 = scalar_lea.vmem %s375, 160 [#allocation6]
        %v1409 = vld [vmem:[%s1408] sm:$0xff]
        %v1410 = vld [vmem:[%s1408 + $0x8] sm:$0xff]
        %v1411 = vrot.slane %v1280, 2
        %v1412 = vrot.slane %v1281, 1
        %v1413 = vsel %vm769, %v1412, %v1411
        %v1414 = vsel %vm772, %v1282, %v1413
        %v1415 = vpack.c.b16 %v1414, %v1414
        %v1418 = vunpack.c.l.b16 %v1409
        %v1419 = vunpack.c.h.b16 %v1409
        %v1420 = vunpack.c.l.b16 %v1410
        %v1421 = vunpack.c.h.b16 %v1410
        %v1422 = vpack.c.b16 %v1420, %v1418
        %v1423 = vpack.c.b16 %v1421, %v1419
        %v1427 = vsel %vm471, %v1415, 0
        %1429 = vmatprep.subr.bf16.mxu0 %v1423
        %1430 = vmatpush1.bf16.msra.mxu0 %v1422
        %1431 = vmatprep.subr.bf16.mxu0 0
        %1432 = vmatpush1.bf16.msra.mxu0 0
        %1433 = vmatprep.subr.bf16.mxu0 0
        %1434 = vmatpush1.bf16.msra.mxu0 0
        %1435 = vmatprep.subr.bf16.mxu0 0
        %1436 = vmatpush1.bf16.msra.mxu0 0
        %1437 = vmatprep.subr.bf16.mxu0 0
        %1438 = vmatpush1.bf16.msra.mxu0 0
        %1439 = vmatprep.subr.bf16.mxu0 0
        %1440 = vmatpush1.bf16.msra.mxu0 0
        %1441 = vmatprep.subr.bf16.mxu0 0
        %1442 = vmatpush1.bf16.msra.mxu0 0
        %1443 = vmatprep.subr.bf16.mxu0 0
        %1444 = vmatpush1.bf16.msra.mxu0 0
        %1445 = vmatprep.subr.bf16.mxu0 0
        %1446 = vmatpush1.bf16.msra.mxu0 0
        %1447 = vmatprep.subr.bf16.mxu0 0
        %1448 = vmatpush1.bf16.msra.mxu0 0
        %1449 = vmatprep.subr.bf16.mxu0 0
        %1450 = vmatpush1.bf16.msra.mxu0 0
        %1451 = vmatprep.subr.bf16.mxu0 0
        %1452 = vmatpush1.bf16.msra.mxu0 0
        %1453 = vmatprep.subr.bf16.mxu0 0
        %1454 = vmatpush1.bf16.msra.mxu0 0
        %1455 = vmatprep.subr.bf16.mxu0 0
        %1456 = vmatpush1.bf16.msra.mxu0 0
        %1457 = vmatprep.subr.bf16.mxu0 0
        %1458 = vmatpush1.bf16.msra.mxu0 0
        %1459 = vmatprep.subr.bf16.mxu0 0
        %1460 = vmatpush1.bf16.msra.mxu0 0
        %1461 = vmatprep.mubr.bf16.mxu0 0
        %1462 = vmatmul.mubr.bf16.gmra.mrb[0].mxu0 %v1427
        %v1463 = vpop.f32.mrb[0].mxu0
        %v1464 = vadd.f32 0.0, %v1463
        %v1465 = vpop.f32.mrb[0].mxu0
        %v1466 = vadd.f32 0.0, %v1465
        %v1467 = vpop.f32.mrb[0].mxu0
        %v1468 = vpop.f32.mrb[0].mxu0
        %1469 = vdwg.mxu0
        %v1470 = vadd.f32 %v1406, %v1464
        %v1471 = vadd.f32 %v1407, %v1466
        %s1472 = scalar_lea.vmem %s375, 176 [#allocation6]
        %v1473 = vld [vmem:[%s1472] sm:$0xff]
        %v1474 = vld [vmem:[%s1472 + $0x8] sm:$0xff]
        %v1475 = vrot.slane %v1280, 3
        %v1476 = vrot.slane %v1281, 2
        %v1477 = vsel %vm769, %v1476, %v1475
        %v1478 = vrot.slane %v1282, 1
        %v1479 = vsel %vm772, %v1478, %v1477
        %v1480 = vpack.c.b16 %v1479, %v1479
        %v1483 = vunpack.c.l.b16 %v1473
        %v1484 = vunpack.c.h.b16 %v1473
        %v1485 = vunpack.c.l.b16 %v1474
        %v1486 = vunpack.c.h.b16 %v1474
        %v1487 = vpack.c.b16 %v1485, %v1483
        %v1488 = vpack.c.b16 %v1486, %v1484
        %v1492 = vsel %vm471, %v1480, 0
        %1494 = vmatprep.subr.bf16.mxu0 %v1488
        %1495 = vmatpush1.bf16.msra.mxu0 %v1487
        %1496 = vmatprep.subr.bf16.mxu0 0
        %1497 = vmatpush1.bf16.msra.mxu0 0
        %1498 = vmatprep.subr.bf16.mxu0 0
        %1499 = vmatpush1.bf16.msra.mxu0 0
        %1500 = vmatprep.subr.bf16.mxu0 0
        %1501 = vmatpush1.bf16.msra.mxu0 0
        %1502 = vmatprep.subr.bf16.mxu0 0
        %1503 = vmatpush1.bf16.msra.mxu0 0
        %1504 = vmatprep.subr.bf16.mxu0 0
        %1505 = vmatpush1.bf16.msra.mxu0 0
        %1506 = vmatprep.subr.bf16.mxu0 0
        %1507 = vmatpush1.bf16.msra.mxu0 0
        %1508 = vmatprep.subr.bf16.mxu0 0
        %1509 = vmatpush1.bf16.msra.mxu0 0
        %1510 = vmatprep.subr.bf16.mxu0 0
        %1511 = vmatpush1.bf16.msra.mxu0 0
        %1512 = vmatprep.subr.bf16.mxu0 0
        %1513 = vmatpush1.bf16.msra.mxu0 0
        %1514 = vmatprep.subr.bf16.mxu0 0
        %1515 = vmatpush1.bf16.msra.mxu0 0
        %1516 = vmatprep.subr.bf16.mxu0 0
        %1517 = vmatpush1.bf16.msra.mxu0 0
        %1518 = vmatprep.subr.bf16.mxu0 0
        %1519 = vmatpush1.bf16.msra.mxu0 0
        %1520 = vmatprep.subr.bf16.mxu0 0
        %1521 = vmatpush1.bf16.msra.mxu0 0
        %1522 = vmatprep.subr.bf16.mxu0 0
        %1523 = vmatpush1.bf16.msra.mxu0 0
        %1524 = vmatprep.subr.bf16.mxu0 0
        %1525 = vmatpush1.bf16.msra.mxu0 0
        %1526 = vmatprep.mubr.bf16.mxu0 0
        %1527 = vmatmul.mubr.bf16.gmra.mrb[0].mxu0 %v1492
        %v1528 = vpop.f32.mrb[0].mxu0
        %v1529 = vadd.f32 0.0, %v1528
        %v1530 = vpop.f32.mrb[0].mxu0
        %v1531 = vadd.f32 0.0, %v1530
        %v1532 = vpop.f32.mrb[0].mxu0
        %v1533 = vpop.f32.mrb[0].mxu0
        %1534 = vdwg.mxu0
        %v1535 = vadd.f32 %v1470, %v1529
        %v1536 = vadd.f32 %v1471, %v1531
        %s1537 = scalar_lea.vmem %s375, 192 [#allocation6]
        %v1538 = vld [vmem:[%s1537] sm:$0xff]
        %v1539 = vld [vmem:[%s1537 + $0x8] sm:$0xff]
        %v1540 = vrot.slane %v1280, 4
        %v1541 = vrot.slane %v1281, 3
        %v1542 = vsel %vm769, %v1541, %v1540
        %v1543 = vrot.slane %v1282, 2
        %v1544 = vsel %vm772, %v1543, %v1542
        %v1545 = vpack.c.b16 %v1544, %v1544
        %v1548 = vunpack.c.l.b16 %v1538
        %v1549 = vunpack.c.h.b16 %v1538
        %v1550 = vunpack.c.l.b16 %v1539
        %v1551 = vunpack.c.h.b16 %v1539
        %v1552 = vpack.c.b16 %v1550, %v1548
        %v1553 = vpack.c.b16 %v1551, %v1549
        %v1557 = vsel %vm471, %v1545, 0
        %1559 = vmatprep.subr.bf16.mxu0 %v1553
        %1560 = vmatpush1.bf16.msra.mxu0 %v1552
        %1561 = vmatprep.subr.bf16.mxu0 0
        %1562 = vmatpush1.bf16.msra.mxu0 0
        %1563 = vmatprep.subr.bf16.mxu0 0
        %1564 = vmatpush1.bf16.msra.mxu0 0
        %1565 = vmatprep.subr.bf16.mxu0 0
        %1566 = vmatpush1.bf16.msra.mxu0 0
        %1567 = vmatprep.subr.bf16.mxu0 0
        %1568 = vmatpush1.bf16.msra.mxu0 0
        %1569 = vmatprep.subr.bf16.mxu0 0
        %1570 = vmatpush1.bf16.msra.mxu0 0
        %1571 = vmatprep.subr.bf16.mxu0 0
        %1572 = vmatpush1.bf16.msra.mxu0 0
        %1573 = vmatprep.subr.bf16.mxu0 0
        %1574 = vmatpush1.bf16.msra.mxu0 0
        %1575 = vmatprep.subr.bf16.mxu0 0
        %1576 = vmatpush1.bf16.msra.mxu0 0
        %1577 = vmatprep.subr.bf16.mxu0 0
        %1578 = vmatpush1.bf16.msra.mxu0 0
        %1579 = vmatprep.subr.bf16.mxu0 0
        %1580 = vmatpush1.bf16.msra.mxu0 0
        %1581 = vmatprep.subr.bf16.mxu0 0
        %1582 = vmatpush1.bf16.msra.mxu0 0
        %1583 = vmatprep.subr.bf16.mxu0 0
        %1584 = vmatpush1.bf16.msra.mxu0 0
        %1585 = vmatprep.subr.bf16.mxu0 0
        %1586 = vmatpush1.bf16.msra.mxu0 0
        %1587 = vmatprep.subr.bf16.mxu0 0
        %1588 = vmatpush1.bf16.msra.mxu0 0
        %1589 = vmatprep.subr.bf16.mxu0 0
        %1590 = vmatpush1.bf16.msra.mxu0 0
        %1591 = vmatprep.mubr.bf16.mxu0 0
        %1592 = vmatmul.mubr.bf16.gmra.mrb[0].mxu0 %v1557
        %v1593 = vpop.f32.mrb[0].mxu0
        %v1594 = vadd.f32 0.0, %v1593
        %v1595 = vpop.f32.mrb[0].mxu0
        %v1596 = vadd.f32 0.0, %v1595
        %v1597 = vpop.f32.mrb[0].mxu0
        %v1598 = vpop.f32.mrb[0].mxu0
        %1599 = vdwg.mxu0
        %v1600 = vadd.f32 %v1535, %v1594
        %v1601 = vadd.f32 %v1536, %v1596
        %s1602 = scalar_lea.vmem %s375, 208 [#allocation6]
        %v1603 = vld [vmem:[%s1602] sm:$0xff]
        %v1604 = vld [vmem:[%s1602 + $0x8] sm:$0xff]
        %v1605 = vrot.slane %v1280, 5
        %v1606 = vrot.slane %v1281, 4
        %v1607 = vsel %vm769, %v1606, %v1605
        %v1608 = vrot.slane %v1282, 3
        %v1609 = vsel %vm772, %v1608, %v1607
        %v1610 = vpack.c.b16 %v1609, %v1609
        %v1613 = vunpack.c.l.b16 %v1603
        %v1614 = vunpack.c.h.b16 %v1603
        %v1615 = vunpack.c.l.b16 %v1604
        %v1616 = vunpack.c.h.b16 %v1604
        %v1617 = vpack.c.b16 %v1615, %v1613
        %v1618 = vpack.c.b16 %v1616, %v1614
        %v1622 = vsel %vm471, %v1610, 0
        %1624 = vmatprep.subr.bf16.mxu0 %v1618
        %1625 = vmatpush1.bf16.msra.mxu0 %v1617
        %1626 = vmatprep.subr.bf16.mxu0 0
        %1627 = vmatpush1.bf16.msra.mxu0 0
        %1628 = vmatprep.subr.bf16.mxu0 0
        %1629 = vmatpush1.bf16.msra.mxu0 0
        %1630 = vmatprep.subr.bf16.mxu0 0
        %1631 = vmatpush1.bf16.msra.mxu0 0
        %1632 = vmatprep.subr.bf16.mxu0 0
        %1633 = vmatpush1.bf16.msra.mxu0 0
        %1634 = vmatprep.subr.bf16.mxu0 0
        %1635 = vmatpush1.bf16.msra.mxu0 0
        %1636 = vmatprep.subr.bf16.mxu0 0
        %1637 = vmatpush1.bf16.msra.mxu0 0
        %1638 = vmatprep.subr.bf16.mxu0 0
        %1639 = vmatpush1.bf16.msra.mxu0 0
        %1640 = vmatprep.subr.bf16.mxu0 0
        %1641 = vmatpush1.bf16.msra.mxu0 0
        %1642 = vmatprep.subr.bf16.mxu0 0
        %1643 = vmatpush1.bf16.msra.mxu0 0
        %1644 = vmatprep.subr.bf16.mxu0 0
        %1645 = vmatpush1.bf16.msra.mxu0 0
        %1646 = vmatprep.subr.bf16.mxu0 0
        %1647 = vmatpush1.bf16.msra.mxu0 0
        %1648 = vmatprep.subr.bf16.mxu0 0
        %1649 = vmatpush1.bf16.msra.mxu0 0
        %1650 = vmatprep.subr.bf16.mxu0 0
        %1651 = vmatpush1.bf16.msra.mxu0 0
        %1652 = vmatprep.subr.bf16.mxu0 0
        %1653 = vmatpush1.bf16.msra.mxu0 0
        %1654 = vmatprep.subr.bf16.mxu0 0
        %1655 = vmatpush1.bf16.msra.mxu0 0
        %1656 = vmatprep.mubr.bf16.mxu0 0
        %1657 = vmatmul.mubr.bf16.gmra.mrb[0].mxu0 %v1622
        %v1658 = vpop.f32.mrb[0].mxu0
        %v1659 = vadd.f32 0.0, %v1658
        %v1660 = vpop.f32.mrb[0].mxu0
        %v1661 = vadd.f32 0.0, %v1660
        %v1662 = vpop.f32.mrb[0].mxu0
        %v1663 = vpop.f32.mrb[0].mxu0
        %1664 = vdwg.mxu0
        %v1665 = vadd.f32 %v1600, %v1659
        %v1666 = vadd.f32 %v1601, %v1661
        %s1667 = scalar_lea.vmem %s375, 224 [#allocation6]
        %v1668 = vld [vmem:[%s1667] sm:$0xff]
        %v1669 = vld [vmem:[%s1667 + $0x8] sm:$0xff]
        %v1670 = vrot.slane %v1280, 6
        %v1671 = vrot.slane %v1281, 5
        %v1672 = vsel %vm769, %v1671, %v1670
        %v1673 = vrot.slane %v1282, 4
        %v1674 = vsel %vm772, %v1673, %v1672
        %v1675 = vpack.c.b16 %v1674, %v1674
        %v1678 = vunpack.c.l.b16 %v1668
        %v1679 = vunpack.c.h.b16 %v1668
        %v1680 = vunpack.c.l.b16 %v1669
        %v1681 = vunpack.c.h.b16 %v1669
        %v1682 = vpack.c.b16 %v1680, %v1678
        %v1683 = vpack.c.b16 %v1681, %v1679
        %v1687 = vsel %vm471, %v1675, 0
        %1689 = vmatprep.subr.bf16.mxu0 %v1683
        %1690 = vmatpush1.bf16.msra.mxu0 %v1682
        %1691 = vmatprep.subr.bf16.mxu0 0
        %1692 = vmatpush1.bf16.msra.mxu0 0
        %1693 = vmatprep.subr.bf16.mxu0 0
        %1694 = vmatpush1.bf16.msra.mxu0 0
        %1695 = vmatprep.subr.bf16.mxu0 0
        %1696 = vmatpush1.bf16.msra.mxu0 0
        %1697 = vmatprep.subr.bf16.mxu0 0
        %1698 = vmatpush1.bf16.msra.mxu0 0
        %1699 = vmatprep.subr.bf16.mxu0 0
        %1700 = vmatpush1.bf16.msra.mxu0 0
        %1701 = vmatprep.subr.bf16.mxu0 0
        %1702 = vmatpush1.bf16.msra.mxu0 0
        %1703 = vmatprep.subr.bf16.mxu0 0
        %1704 = vmatpush1.bf16.msra.mxu0 0
        %1705 = vmatprep.subr.bf16.mxu0 0
        %1706 = vmatpush1.bf16.msra.mxu0 0
        %1707 = vmatprep.subr.bf16.mxu0 0
        %1708 = vmatpush1.bf16.msra.mxu0 0
        %1709 = vmatprep.subr.bf16.mxu0 0
        %1710 = vmatpush1.bf16.msra.mxu0 0
        %1711 = vmatprep.subr.bf16.mxu0 0
        %1712 = vmatpush1.bf16.msra.mxu0 0
        %1713 = vmatprep.subr.bf16.mxu0 0
        %1714 = vmatpush1.bf16.msra.mxu0 0
        %1715 = vmatprep.subr.bf16.mxu0 0
        %1716 = vmatpush1.bf16.msra.mxu0 0
        %1717 = vmatprep.subr.bf16.mxu0 0
        %1718 = vmatpush1.bf16.msra.mxu0 0
        %1719 = vmatprep.subr.bf16.mxu0 0
        %1720 = vmatpush1.bf16.msra.mxu0 0
        %1721 = vmatprep.mubr.bf16.mxu0 0
        %1722 = vmatmul.mubr.bf16.gmra.mrb[0].mxu0 %v1687
        %v1723 = vpop.f32.mrb[0].mxu0
        %v1724 = vadd.f32 0.0, %v1723
        %v1725 = vpop.f32.mrb[0].mxu0
        %v1726 = vadd.f32 0.0, %v1725
        %v1727 = vpop.f32.mrb[0].mxu0
        %v1728 = vpop.f32.mrb[0].mxu0
        %1729 = vdwg.mxu0
        %v1730 = vadd.f32 %v1665, %v1724
        %v1731 = vadd.f32 %v1666, %v1726
        %s1732 = scalar_lea.vmem %s375, 240 [#allocation6]
        %v1733 = vld [vmem:[%s1732] sm:$0xff]
        %v1734 = vld [vmem:[%s1732 + $0x8] sm:$0xff]
        %v1735 = vrot.slane %v1280, 7
        %v1736 = vrot.slane %v1281, 6
        %v1737 = vsel %vm769, %v1736, %v1735
        %v1738 = vrot.slane %v1282, 5
        %v1739 = vsel %vm772, %v1738, %v1737
        %v1740 = vpack.c.b16 %v1739, %v1739
        %v1743 = vunpack.c.l.b16 %v1733
        %v1744 = vunpack.c.h.b16 %v1733
        %v1745 = vunpack.c.l.b16 %v1734
        %v1746 = vunpack.c.h.b16 %v1734
        %v1747 = vpack.c.b16 %v1745, %v1743
        %v1748 = vpack.c.b16 %v1746, %v1744
        %v1752 = vsel %vm471, %v1740, 0
        %1754 = vmatprep.subr.bf16.mxu0 %v1748
        %1755 = vmatpush1.bf16.msra.mxu0 %v1747
        %1756 = vmatprep.subr.bf16.mxu0 0
        %1757 = vmatpush1.bf16.msra.mxu0 0
        %1758 = vmatprep.subr.bf16.mxu0 0
        %1759 = vmatpush1.bf16.msra.mxu0 0
        %1760 = vmatprep.subr.bf16.mxu0 0
        %1761 = vmatpush1.bf16.msra.mxu0 0
        %1762 = vmatprep.subr.bf16.mxu0 0
        %1763 = vmatpush1.bf16.msra.mxu0 0
        %1764 = vmatprep.subr.bf16.mxu0 0
        %1765 = vmatpush1.bf16.msra.mxu0 0
        %1766 = vmatprep.subr.bf16.mxu0 0
        %1767 = vmatpush1.bf16.msra.mxu0 0
        %1768 = vmatprep.subr.bf16.mxu0 0
        %1769 = vmatpush1.bf16.msra.mxu0 0
        %1770 = vmatprep.subr.bf16.mxu0 0
        %1771 = vmatpush1.bf16.msra.mxu0 0
        %1772 = vmatprep.subr.bf16.mxu0 0
        %1773 = vmatpush1.bf16.msra.mxu0 0
        %1774 = vmatprep.subr.bf16.mxu0 0
        %1775 = vmatpush1.bf16.msra.mxu0 0
        %1776 = vmatprep.subr.bf16.mxu0 0
        %1777 = vmatpush1.bf16.msra.mxu0 0
        %1778 = vmatprep.subr.bf16.mxu0 0
        %1779 = vmatpush1.bf16.msra.mxu0 0
        %1780 = vmatprep.subr.bf16.mxu0 0
        %1781 = vmatpush1.bf16.msra.mxu0 0
        %1782 = vmatprep.subr.bf16.mxu0 0
        %1783 = vmatpush1.bf16.msra.mxu0 0
        %1784 = vmatprep.subr.bf16.mxu0 0
        %1785 = vmatpush1.bf16.msra.mxu0 0
        %1786 = vmatprep.mubr.bf16.mxu0 0
        %1787 = vmatmul.mubr.bf16.gmra.mrb[0].mxu0 %v1752
        %v1788 = vpop.f32.mrb[0].mxu0
        %v1789 = vadd.f32 0.0, %v1788
        %v1790 = vpop.f32.mrb[0].mxu0
        %v1791 = vadd.f32 0.0, %v1790
        %v1792 = vpop.f32.mrb[0].mxu0
        %v1793 = vpop.f32.mrb[0].mxu0
        %1794 = vdwg.mxu0
        %v1795 = vadd.f32 %v1730, %v1789
        %v1796 = vadd.f32 %v1731, %v1791
        %v1797 = vld [vmem:[%s447] sm:$0xf]
        %s1799 = vtos %v1797
        %v1800 = vstv %s1799
        %v1802 = vmul.f32 %v1795, %v1800
        %v1803 = vmul.f32 %v1796, %v1800
        %v1804 = vmax.f32 %v1802, 0.0
        %v1805 = vmax.f32 %v1803, 0.0
        %v1806 = vmin.f32 %v1804, 1.0
        %v1807 = vmin.f32 %v1805, 1.0
        %v1808 = vmul.f32 %v1806, 0.299
        %v1809 = vmul.f32 %v1807, 0.299
        %v1810 = vmul.f32 %v1806, 0.587
        %v1811 = vmul.f32 %v1807, 0.587
        %v1814 = vrot.slane %v1810, 1
        %v1815 = vrot.slane %v1811, 1
        %v1818 = vadd.f32 %v1808, %v1814
        %v1819 = vadd.f32 %v1809, %v1815
        %v1820 = vmul.f32 %v1806, 0.114
        %v1821 = vmul.f32 %v1807, 0.114
        %v1824 = vrot.slane %v1820, 2
        %v1825 = vrot.slane %v1821, 2
        %v1828 = vadd.f32 %v1818, %v1824
        %v1829 = vadd.f32 %v1819, %v1825
        %vm1830 = vcmask 1040384
        %v1831 = vsel %vm1830, %v1828, 0.0
        %v1832 = vsel %vm1830, %v1829, 0.0
        %v1833 = vadd.f32 %v1831, %v1832
        %1834 = vadd.xlane.f32.xlu0 %v1833
        %v1835 = vpop.xlane.xlu0 %1834
        %v1836 = vrcp.pop 256.0
        %v1837 = vmul.f32 %v1835, %v1836
        %v1838 = vlaneseq
        %v1839 = vshrl.u32 %v1838, 7
        %v1840 = vsub.s32 0, %v1839
        %v1841 = vrot.slane %v1837, %v1840
        %v1842 = vsub.f32 %v1806, %v1841
        %v1843 = vsub.f32 %v1807, %v1841
        %v1844 = vrot.slane %v1797, 1
        %s1845 = vtos %v1844
        %v1846 = vstv %s1845
        %v1848 = vmul.f32 %v1846, %v1842
        %v1849 = vmul.f32 %v1846, %v1843
        %v1850 = vadd.f32 %v1841, %v1848
        %v1851 = vadd.f32 %v1841, %v1849
        %v1852 = vmax.f32 %v1850, 0.0
        %v1853 = vmax.f32 %v1851, 0.0
        %v1854 = vmin.f32 %v1852, 1.0
        %v1855 = vmin.f32 %v1853, 1.0
        %v1856 = vmul.f32 %v1854, 0.299
        %v1857 = vmul.f32 %v1855, 0.299
        %v1858 = vmul.f32 %v1854, 0.587
        %v1859 = vmul.f32 %v1855, 0.587
        %v1862 = vrot.slane %v1858, 1
        %v1863 = vrot.slane %v1859, 1
        %v1866 = vadd.f32 %v1856, %v1862
        %v1867 = vadd.f32 %v1857, %v1863
        %v1868 = vmul.f32 %v1854, 0.114
        %v1869 = vmul.f32 %v1855, 0.114
        %v1872 = vrot.slane %v1868, 2
        %v1873 = vrot.slane %v1869, 2
        %v1876 = vadd.f32 %v1866, %v1872
        %v1877 = vadd.f32 %v1867, %v1873
        %v1878 = vlaneseq
        %v1879 = vshrl.u32 %v1878, 7
        %v1880 = vsub.s32 0, %v1879
        %v1881 = vrot.slane %v1876, %v1880
        %v1882 = vlaneseq
        %v1883 = vshrl.u32 %v1882, 7
        %v1884 = vsub.s32 0, %v1883
        %v1885 = vrot.slane %v1877, %v1884
        %v1886 = vsub.f32 %v1854, %v1881
        %v1887 = vsub.f32 %v1855, %v1885
        %v1888 = vrot.slane %v1797, 2
        %s1889 = vtos %v1888
        %v1890 = vstv %s1889
        %v1892 = vmul.f32 %v1890, %v1886
        %v1893 = vmul.f32 %v1890, %v1887
        %v1894 = vadd.f32 %v1881, %v1892
        %v1895 = vadd.f32 %v1885, %v1893
        %v1896 = vmax.f32 %v1894, 0.0
        %v1897 = vmax.f32 %v1895, 0.0
        %v1898 = vmin.f32 %v1896, 1.0
        %v1899 = vmin.f32 %v1897, 1.0
        %v1900 = vmul.f32 %v1898, 0.299
        %v1901 = vmul.f32 %v1899, 0.299
        %v1902 = vmul.f32 %v1898, 0.587
        %v1903 = vmul.f32 %v1899, 0.587
        %v1906 = vrot.slane %v1902, 1
        %v1907 = vrot.slane %v1903, 1
        %v1910 = vadd.f32 %v1900, %v1906
        %v1911 = vadd.f32 %v1901, %v1907
        %v1912 = vmul.f32 %v1898, 0.114
        %v1913 = vmul.f32 %v1899, 0.114
        %v1916 = vrot.slane %v1912, 2
        %v1917 = vrot.slane %v1913, 2
        %v1920 = vadd.f32 %v1910, %v1916
        %v1921 = vadd.f32 %v1911, %v1917
        %1922 = vset.pattern.permute.xlu0 0
        %1923 = vperm.xlu0 %1922, %v1797
        %v1924 = vpop.permute.xlu0 %1923
        %v1928 = vrot.slane %v1920, 5
        %v1929 = vrot.slane %v1921, 5
        %v1932 = vmul.f32 %v1924, %v1928
        %v1933 = vmul.f32 %v1924, %v1929
        %v1934 = vsub.f32 1.0, %v1797
        %v1936 = vrot.slane %v1934, 3
        %s1937 = vtos %v1936
        %v1938 = vstv %s1937
        %v1940 = vmul.f32 %v1938, %v1898
        %v1941 = vmul.f32 %v1938, %v1899
        %v1942 = vlaneseq
        %v1943 = vshrl.u32 %v1942, 7
        %v1944 = vsub.s32 3, %v1943
        %v1945 = vrot.slane %v1932, %v1944
        %v1946 = vlaneseq
        %v1947 = vshrl.u32 %v1946, 7
        %v1948 = vsub.s32 3, %v1947
        %v1949 = vrot.slane %v1933, %v1948
        %v1950 = vadd.f32 %v1945, %v1940
        %v1951 = vadd.f32 %v1949, %v1941
        %v1952 = vld [vmem:[%s6] sm:$0x7]
        %v1953 = vld [vmem:[%s6 + $0x4] sm:$0x7]
        %v1954 = vpack.c.bf16 %v1950, %v1950
        %v1955 = vpack.c.bf16 %v1951, %v1951
        %v1956 = vld [vmem:[%s384] sm:$0xff]
        %v1957 = vld [vmem:[%s384 + $0x8] sm:$0xff]
        %v1958 = vld [vmem:[%s384 + $0x10] sm:$0xff]
        %v1959 = vld [vmem:[%s384 + $0x18] sm:$0xff]
        %v1960 = vld [vmem:[%s384 + $0x20] sm:$0xff]
        %v1961 = vld [vmem:[%s384 + $0x28] sm:$0xff]
        %v1962 = vld [vmem:[%s384 + $0x30] sm:$0xff]
        %v1963 = vld [vmem:[%s384 + $0x38] sm:$0xff]
        %v1964 = vld [vmem:[%s384 + $0x40] sm:$0xff]
        %v1965 = vld [vmem:[%s384 + $0x48] sm:$0xff]
        %v1966 = vld [vmem:[%s384 + $0x50] sm:$0xff]
        %v1967 = vld [vmem:[%s384 + $0x58] sm:$0xff]
        %v1968 = vld [vmem:[%s384 + $0x60] sm:$0xff]
        %v1969 = vld [vmem:[%s384 + $0x68] sm:$0xff]
        %v1970 = vld [vmem:[%s384 + $0x70] sm:$0xff]
        %v1971 = vld [vmem:[%s384 + $0x78] sm:$0xff]
        %v1972 = vld [vmem:[%s384 + $0x80] sm:$0xff]
        %v1973 = vld [vmem:[%s384 + $0x88] sm:$0xff]
        %v1974 = vld [vmem:[%s384 + $0x90] sm:$0xff]
        %v1975 = vld [vmem:[%s384 + $0x98] sm:$0xff]
        %v1976 = vld [vmem:[%s384 + $0xa0] sm:$0xff]
        %v1977 = vld [vmem:[%s384 + $0xa8] sm:$0xff]
        %v1978 = vld [vmem:[%s384 + $0xb0] sm:$0xff]
        %v1979 = vld [vmem:[%s384 + $0xb8] sm:$0xff]
        %v1980 = vld [vmem:[%s384 + $0xc0] sm:$0xff]
        %v1981 = vld [vmem:[%s384 + $0xc8] sm:$0xff]
        %v1982 = vld [vmem:[%s384 + $0xd0] sm:$0xff]
        %v1983 = vld [vmem:[%s384 + $0xd8] sm:$0xff]
        %v1984 = vld [vmem:[%s384 + $0xe0] sm:$0xff]
        %v1985 = vld [vmem:[%s384 + $0xe8] sm:$0xff]
        %v1986 = vld [vmem:[%s384 + $0xf0] sm:$0xff]
        %v1987 = vld [vmem:[%s384 + $0xf8] sm:$0xff]
        %v2020 = vunpack.c.l.b16 %v1956
        %v2021 = vunpack.c.h.b16 %v1956
        %v2022 = vunpack.c.l.b16 %v1957
        %v2023 = vunpack.c.h.b16 %v1957
        %v2024 = vunpack.c.l.b16 %v1958
        %v2025 = vunpack.c.h.b16 %v1958
        %v2026 = vunpack.c.l.b16 %v1959
        %v2027 = vunpack.c.h.b16 %v1959
        %v2028 = vunpack.c.l.b16 %v1960
        %v2029 = vunpack.c.h.b16 %v1960
        %v2030 = vunpack.c.l.b16 %v1961
        %v2031 = vunpack.c.h.b16 %v1961
        %v2032 = vunpack.c.l.b16 %v1962
        %v2033 = vunpack.c.h.b16 %v1962
        %v2034 = vunpack.c.l.b16 %v1963
        %v2035 = vunpack.c.h.b16 %v1963
        %v2036 = vunpack.c.l.b16 %v1964
        %v2037 = vunpack.c.h.b16 %v1964
        %v2038 = vunpack.c.l.b16 %v1965
        %v2039 = vunpack.c.h.b16 %v1965
        %v2040 = vunpack.c.l.b16 %v1966
        %v2041 = vunpack.c.h.b16 %v1966
        %v2042 = vunpack.c.l.b16 %v1967
        %v2043 = vunpack.c.h.b16 %v1967
        %v2044 = vunpack.c.l.b16 %v1968
        %v2045 = vunpack.c.h.b16 %v1968
        %v2046 = vunpack.c.l.b16 %v1969
        %v2047 = vunpack.c.h.b16 %v1969
        %v2048 = vunpack.c.l.b16 %v1970
        %v2049 = vunpack.c.h.b16 %v1970
        %v2050 = vunpack.c.l.b16 %v1971
        %v2051 = vunpack.c.h.b16 %v1971
        %v2052 = vunpack.c.l.b16 %v1972
        %v2053 = vunpack.c.h.b16 %v1972
        %v2054 = vunpack.c.l.b16 %v1973
        %v2055 = vunpack.c.h.b16 %v1973
        %v2056 = vunpack.c.l.b16 %v1974
        %v2057 = vunpack.c.h.b16 %v1974
        %v2058 = vunpack.c.l.b16 %v1975
        %v2059 = vunpack.c.h.b16 %v1975
        %v2060 = vunpack.c.l.b16 %v1976
        %v2061 = vunpack.c.h.b16 %v1976
        %v2062 = vunpack.c.l.b16 %v1977
        %v2063 = vunpack.c.h.b16 %v1977
        %v2064 = vunpack.c.l.b16 %v1978
        %v2065 = vunpack.c.h.b16 %v1978
        %v2066 = vunpack.c.l.b16 %v1979
        %v2067 = vunpack.c.h.b16 %v1979
        %v2068 = vunpack.c.l.b16 %v1980
        %v2069 = vunpack.c.h.b16 %v1980
        %v2070 = vunpack.c.l.b16 %v1981
        %v2071 = vunpack.c.h.b16 %v1981
        %v2072 = vunpack.c.l.b16 %v1982
        %v2073 = vunpack.c.h.b16 %v1982
        %v2074 = vunpack.c.l.b16 %v1983
        %v2075 = vunpack.c.h.b16 %v1983
        %v2076 = vunpack.c.l.b16 %v1984
        %v2077 = vunpack.c.h.b16 %v1984
        %v2078 = vunpack.c.l.b16 %v1985
        %v2079 = vunpack.c.h.b16 %v1985
        %v2080 = vunpack.c.l.b16 %v1986
        %v2081 = vunpack.c.h.b16 %v1986
        %v2082 = vunpack.c.l.b16 %v1987
        %v2083 = vunpack.c.h.b16 %v1987
        %v2084 = vpack.c.b16 %v2022, %v2020
        %v2085 = vpack.c.b16 %v2023, %v2021
        %v2086 = vpack.c.b16 %v2026, %v2024
        %v2087 = vpack.c.b16 %v2027, %v2025
        %v2088 = vpack.c.b16 %v2030, %v2028
        %v2089 = vpack.c.b16 %v2031, %v2029
        %v2090 = vpack.c.b16 %v2034, %v2032
        %v2091 = vpack.c.b16 %v2035, %v2033
        %v2092 = vpack.c.b16 %v2038, %v2036
        %v2093 = vpack.c.b16 %v2039, %v2037
        %v2094 = vpack.c.b16 %v2042, %v2040
        %v2095 = vpack.c.b16 %v2043, %v2041
        %v2096 = vpack.c.b16 %v2046, %v2044
        %v2097 = vpack.c.b16 %v2047, %v2045
        %v2098 = vpack.c.b16 %v2050, %v2048
        %v2099 = vpack.c.b16 %v2051, %v2049
        %v2100 = vpack.c.b16 %v2054, %v2052
        %v2101 = vpack.c.b16 %v2055, %v2053
        %v2102 = vpack.c.b16 %v2058, %v2056
        %v2103 = vpack.c.b16 %v2059, %v2057
        %v2104 = vpack.c.b16 %v2062, %v2060
        %v2105 = vpack.c.b16 %v2063, %v2061
        %v2106 = vpack.c.b16 %v2066, %v2064
        %v2107 = vpack.c.b16 %v2067, %v2065
        %v2108 = vpack.c.b16 %v2070, %v2068
        %v2109 = vpack.c.b16 %v2071, %v2069
        %v2110 = vpack.c.b16 %v2074, %v2072
        %v2111 = vpack.c.b16 %v2075, %v2073
        %v2112 = vpack.c.b16 %v2078, %v2076
        %v2113 = vpack.c.b16 %v2079, %v2077
        %v2114 = vpack.c.b16 %v2082, %v2080
        %v2115 = vpack.c.b16 %v2083, %v2081
        %2148 = vmatprep.subr.bf16.mxu0 %v2085
        %2149 = vmatpush1.bf16.msra.mxu0 %v2084
        %2150 = vmatprep.subr.bf16.mxu0 %v2087
        %2151 = vmatpush1.bf16.msra.mxu0 %v2086
        %2152 = vmatprep.subr.bf16.mxu0 %v2089
        %2153 = vmatpush1.bf16.msra.mxu0 %v2088
        %2154 = vmatprep.subr.bf16.mxu0 %v2091
        %2155 = vmatpush1.bf16.msra.mxu0 %v2090
        %2156 = vmatprep.subr.bf16.mxu0 %v2093
        %2157 = vmatpush1.bf16.msra.mxu0 %v2092
        %2158 = vmatprep.subr.bf16.mxu0 %v2095
        %2159 = vmatpush1.bf16.msra.mxu0 %v2094
        %2160 = vmatprep.subr.bf16.mxu0 %v2097
        %2161 = vmatpush1.bf16.msra.mxu0 %v2096
        %2162 = vmatprep.subr.bf16.mxu0 %v2099
        %2163 = vmatpush1.bf16.msra.mxu0 %v2098
        %2164 = vmatprep.subr.bf16.mxu0 %v2101
        %2165 = vmatpush1.bf16.msra.mxu0 %v2100
        %2166 = vmatprep.subr.bf16.mxu0 %v2103
        %2167 = vmatpush1.bf16.msra.mxu0 %v2102
        %2168 = vmatprep.subr.bf16.mxu0 %v2105
        %2169 = vmatpush1.bf16.msra.mxu0 %v2104
        %2170 = vmatprep.subr.bf16.mxu0 %v2107
        %2171 = vmatpush1.bf16.msra.mxu0 %v2106
        %2172 = vmatprep.subr.bf16.mxu0 %v2109
        %2173 = vmatpush1.bf16.msra.mxu0 %v2108
        %2174 = vmatprep.subr.bf16.mxu0 %v2111
        %2175 = vmatpush1.bf16.msra.mxu0 %v2110
        %2176 = vmatprep.subr.bf16.mxu0 %v2113
        %2177 = vmatpush1.bf16.msra.mxu0 %v2112
        %2178 = vmatprep.subr.bf16.mxu0 %v2115
        %2179 = vmatpush1.bf16.msra.mxu0 %v2114
        %2180 = vmatprep.mubr.bf16.mxu0 %v1955
        %2181 = vmatmul.mubr.bf16.gmra.mrb[0].mxu0 %v1954
        %v2182 = vpop.f32.mrb[0].mxu0
        %v2183 = vadd.f32 0.0, %v2182
        %v2184 = vpop.f32.mrb[0].mxu0
        %v2185 = vadd.f32 0.0, %v2184
        %v2186 = vpop.f32.mrb[0].mxu0
        %v2187 = vpop.f32.mrb[0].mxu0
        %2188 = vdwg.mxu0
        %2190 = vset.pattern.permute.xlu0 0
        %2191 = vperm.xlu0 %2190, %v1952
        %v2192 = vpop.permute.xlu0 %2191
        %v2194 = vsub.f32 %v2183, %v2192
        %v2195 = vsub.f32 %v2185, %v2192
        %2197 = vset.pattern.permute.xlu0 0
        %2198 = vperm.xlu0 %2197, %v1953
        %v2199 = vpop.permute.xlu0 %2198
        %v2201 = vmul.f32 %v2194, %v2199
        %v2202 = vmul.f32 %v2195, %v2199
        %v2205 = vcombine.low %v2201, %v2202
        %2207 = vst [vmem:[%s452] sm:$0x77] %v2205
        %p2208 = scmp.lt.s32.totalorder %s27, 1
        %s2209 = scalar_select %p2208, %s27, 1
        %s2210 = smul.addr %s2209, 2
        %s2211 = smul.addr %s2210, 4
        %s2212 = scalar_lea.vmem %s7, %s2211
        // Predicated region
        $region65: #{tpu_custom_call.1} parent=47 // pred_check
          %p2213 = pneg %p222
        $region66: #{tpu_custom_call.1} parent=47 // pred_check_branch
          %2215 = sbr.rel (%p2213) target = $region68
        $region67: #{tpu_custom_call.1} parent=47 // pred_region
          _
        $region68: #{tpu_custom_call.1} parent=47 // pred_fallthru
          _
      $region48: #{tpu_custom_call.1} parent=5 // pred_fallthru
        _
      %p2216 = scmp.le.s32.totalorder 2, %s22
      // Predicated region
      $region69: #{tpu_custom_call.1} parent=5 // pred_check
        %p2217 = pneg %p2216
      $region70: #{tpu_custom_call.1} parent=5 // pred_check_branch
        %2219 = sbr.rel (%p2217) target = $region72
      $region71: #{tpu_custom_call.1} parent=5 // pred_region
        %s2220 = ssub.s32 %s22, 2
        // Predicated region
        $region73: #{tpu_custom_call.1} parent=71 // pred_check
          %p2221 = pneg %p228
        $region74: #{tpu_custom_call.1} parent=71 // pred_check_branch
          %2223 = sbr.rel (%p2221) target = $region76
        $region75: #{tpu_custom_call.1} parent=71 // pred_region
          %p2224 = scmp.lt.s32.totalorder %s28, 1
          %s2225 = scalar_select %p2224, %s28, 1
          %s2226 = smul.addr %s2225, 2
          %s2227 = smul.addr %s2226, 4
          %s2228 = scalar_lea.vmem %s7, %s2227
        $region76: #{tpu_custom_call.1} parent=71 // pred_fallthru
          _
      $region72: #{tpu_custom_call.1} parent=5 // pred_fallthru
        _
    $region6: #{tpu_custom_call.1} parent=1 // loop_footer
      %s26 = sadd.s32 1, %s22
    $region7: #{tpu_custom_call.1} parent=1 // loop_footer_branch
      %21 = sbr.rel target = $region3
    $region8: #{tpu_custom_call.1} parent=1 // loop_exit
      _
    %2229 = vsyncpa [#allocation3], 1
    %s2230 = scalar_lea.sflag [#allocation3], 1
    %2231 = vsyncpa %s2230, 1
    %2232 = vsyncpa [#allocation5], 1
    %s2233 = scalar_lea.sflag [#allocation5], 1
    %2234 = vsyncpa %s2233, 1
    %2235 = vsyncpa [#allocation8], 1
    %s2236 = scalar_lea.sflag [#allocation8], 1
    %2237 = vsyncpa %s2236, 1

</llo_original>
